<compile_context>
chip_gen: v5e
topology: v5e:2x2
jax: 0.10.0
libtpu: 0.0.40
codegen_flags: <defaults>
</compile_context>

<pallas_src>
import functools

import jax
import jax.numpy as jnp
from jax.experimental import pallas as pl
from jax.experimental.pallas import tpu as pltpu


# ----------------------------------------------------------------------------
# Generation-aware VMEM sizing (v5e/v6e: 128 MiB, v7x: 64 MiB per TensorCore)
# ----------------------------------------------------------------------------
def _vmem_capacity_bytes():
    try:
        return int(pltpu.get_tpu_info().vmem_capacity_bytes)
    except Exception:
        return 64 * 1024 * 1024          # conservative default: v7x per-core VMEM


_VMEM_CAP = _vmem_capacity_bytes()
_VMEM_BUDGET = max(24 * 1024 * 1024, min(_VMEM_CAP // 2, 80 * 1024 * 1024))


def _pad_lane(c):
    return ((c + 127) // 128) * 128


def _conv_vmem_need(th, W, Cin, tn, p, fold):
    """Rough per-grid-step VMEM footprint (bytes) of the conv kernel."""
    TH2, Wp = th + 2 * p, W + 2 * p
    cpad, npad = _pad_lane(Cin), _pad_lane(tn)
    win = TH2 * Wp * cpad * 2                        # assembled window scratch (bf16)
    xin = 2 * (th + 2 * p) * W * cpad * 2            # double-buffered body + strips
    wts = 2 * 9 * Cin * npad * 2                     # double-buffered weight tile
    outb = 2 * th * W * npad * 2                     # double-buffered output tile
    acc = th * W * npad * 4                          # f32 accumulator scratch
    slab = th * W * (3 if fold else 1) * cpad * 2    # transient shifted patch
    pop = th * W * npad * 4                          # materialized matmul result
    return win + xin + wts + outb + acc + slab + pop + (2 << 20)


def _vmem_limit(need):
    hi = max(32 * 1024 * 1024, _VMEM_CAP - 8 * 1024 * 1024)
    return int(min(hi, max(32 * 1024 * 1024, int(1.3 * need) + (4 << 20))))


def _pick_th(H, W, Cin, tn, p, *, fold, max_th=None, align8_or_full=False):
    """Largest H-tile dividing H whose per-step VMEM footprint fits the budget."""
    cands = [d for d in range(1, H + 1) if H % d == 0]
    if max_th is not None:
        lim = [d for d in cands if d <= max_th]
        cands = lim if lim else [min(cands)]

    def legal(d):
        if d == H:
            return True
        if d < p or d % p != 0:          # halo strips are p rows tall -> th % p == 0
            return False
        if align8_or_full and d % 8 != 0:
            return False
        return True

    legal_c = [d for d in cands if legal(d)]
    if not legal_c:
        return H
    fit = [d for d in legal_c if _conv_vmem_need(d, W, Cin, tn, p, fold) <= _VMEM_BUDGET]
    pool = fit if fit else [min(legal_c)]
    pref = [d for d in pool if d % 8 == 0 or d == H]   # sublane-aligned tiles preferred
    return max(pref) if pref else max(pool)


# ----------------------------------------------------------------------------
# In-kernel helpers (shared by the generic conv and the fused head)
# ----------------------------------------------------------------------------
def _assemble_window(win, x_top, x_mid, x_bot, i, *, th, W, p, n_h):
    """Build the zero-padded (th+2p, W+2p, Cin) input window in VMEM.

    Halo rows come from two extra auto-pipelined strip BlockSpecs on the raw
    activation (no wrapper-side pad/stack HBM round trip).  Out-of-range halos at
    the image top/bottom border are zeroed with a branch-free 0/1 mask.
    """
    TH2, Wp = th + 2 * p, W + 2 * p
    Cin = x_mid.shape[-1]
    zcol = jnp.zeros((TH2, p, Cin), dtype=win.dtype)
    win[:, 0:p, :] = zcol                              # left  W-halo (always zero pad)
    win[:, p + W:Wp, :] = zcol                         # right W-halo (always zero pad)
    if x_top is None:                                  # single H tile: halos are pure pad
        zrow = jnp.zeros((p, W, Cin), dtype=win.dtype)
        win[0:p, p:p + W, :] = zrow
        win[p + th:TH2, p:p + W, :] = zrow
    else:
        win[0:p, p:p + W, :] = x_top[0] * (i > 0).astype(win.dtype)
        win[p + th:TH2, p:p + W, :] = x_bot[0] * (i < n_h - 1).astype(win.dtype)
    win[p:p + th, p:p + W, :] = x_mid[0]


def _accumulate_taps(win, w_ref, acc_ref, *, th, W, p, dil, fold):
    """MXU-accumulate all 3x3 taps of the assembled window into the f32 scratch."""
    Cin = win.shape[-1]
    if fold:
        # Small Cin: fold the 3 KW taps into the matmul K dimension (K = 3*Cin)
        # -> 3 deep matmuls instead of 9 shallow ones (fills the 256-deep MXU on
        # v6e/v7x) and 3x fewer accumulator read-modify-write passes.
        for kh in range(3):
            rows = win[kh * dil:kh * dil + th]                       # (th, W+2p, Cin)
            patch = jnp.concatenate(
                [rows[:, kw * dil:kw * dil + W, :] for kw in range(3)],
                axis=-1).reshape(th * W, 3 * Cin)
            c = jnp.dot(patch, w_ref[kh], preferred_element_type=jnp.float32)
            if kh == 0:
                acc_ref[...] = c
            else:
                acc_ref[...] += c
    else:
        # Large Cin: K=Cin already fills the MXU; keep 9 taps but hoist the kw
        # (sublane) shift and consume each shifted slab fully (all kh matmuls)
        # before building the next one -> bounded live ranges / no extra spills.
        first = True
        for kw in range(3):
            xs = win[:, kw * dil:kw * dil + W, :]                    # (th+2p, W, Cin)
            for kh in range(3):
                patch = xs[kh * dil:kh * dil + th].reshape(th * W, Cin)
                c = jnp.dot(patch, w_ref[kh, kw], preferred_element_type=jnp.float32)
                if first:
                    acc_ref[...] = c
                    first = False
                else:
                    acc_ref[...] += c


# ----------------------------------------------------------------------------
# Generic 3x3 conv kernel: one grid step = one (batch, Cout-tile, H-tile).
# ----------------------------------------------------------------------------
def _conv_kernel(*refs, th, W, p, dil, relu, fold, n_h, has_strips):
    if has_strips:
        x_top, x_mid, x_bot, w_ref, b_ref, o_ref, win_ref, acc_ref = refs
    else:
        x_mid, w_ref, b_ref, o_ref, win_ref, acc_ref = refs
        x_top = x_bot = None
    i = pl.program_id(2)
    _assemble_window(win_ref, x_top, x_mid, x_bot, i, th=th, W=W, p=p, n_h=n_h)
    _accumulate_taps(win_ref, w_ref, acc_ref, th=th, W=W, p=p, dil=dil, fold=fold)
    tn = o_ref.shape[-1]
    res = acc_ref[...] + b_ref[0]
    if relu:
        res = jnp.maximum(res, 0.0)
    o_ref[0] = res.reshape(th, W, tn).astype(o_ref.dtype)


def conv2d(x, w, b, *, dilation=1, relu=True, out_dtype=jnp.bfloat16, max_th=None):
    """'same'-padded 3x3 conv (+bias, +ReLU). x: (N,H,W,Cin) bf16, w: (3,3,Cin,Cout)."""
    N, H, W, Cin = x.shape
    KH, KW, _, Cout = w.shape
    assert KH == 3 and KW == 3
    p = dilation * (KH // 2)                 # matches PyTorch padding = dilation
    # Lane-dense Cout tiles; 256 fills the 256-wide v6e/v7x MXU and keeps a 2-way
    # Cout split for the 512-channel layers (both v7x TensorCores busy at N=1).
    tn = 256 if Cout % 256 == 0 else (128 if Cout % 128 == 0 else Cout)
    fold = KW * Cin <= 512                   # fold KW into K only when it fills depth
    th = _pick_th(H, W, Cin, tn, p, fold=fold, max_th=max_th)
    n_h = H // th
    TH2, Wp = th + 2 * p, W + 2 * p
    has_strips = n_h > 1
    n_j = Cout // tn

    w_arg = w.reshape(KH, KW * Cin, Cout) if fold else w
    b_arg = b.reshape(1, Cout).astype(jnp.float32)

    kernel = functools.partial(_conv_kernel, th=th, W=W, p=p, dil=dilation,
                               relu=relu, fold=fold, n_h=n_h, has_strips=has_strips)

    mid_spec = pl.BlockSpec((1, th, W, Cin), lambda n, j, i: (n, i, 0, 0))
    if fold:
        w_spec = pl.BlockSpec((KH, KW * Cin, tn), lambda n, j, i: (0, 0, j))
    else:
        w_spec = pl.BlockSpec((KH, KW, Cin, tn), lambda n, j, i: (0, 0, 0, j))
    b_spec = pl.BlockSpec((1, tn), lambda n, j, i: (0, j))

    if has_strips:
        r_stride = th // p                   # strip blocks are p rows tall
        n_strip = H // p
        top_spec = pl.BlockSpec(
            (1, p, W, Cin),
            lambda n, j, i: (n, jnp.maximum(i * r_stride - 1, 0), 0, 0))
        bot_spec = pl.BlockSpec(
            (1, p, W, Cin),
            lambda n, j, i: (n, jnp.minimum((i + 1) * r_stride, n_strip - 1), 0, 0))
        in_specs = [top_spec, mid_spec, bot_spec, w_spec, b_spec]
        operands = (x, x, x, w_arg, b_arg)
    else:
        in_specs = [mid_spec, w_spec, b_spec]
        operands = (x, w_arg, b_arg)

    need = _conv_vmem_need(th, W, Cin, tn, p, fold)
    flops = 2 * N * H * W * KH * KW * Cin * Cout
    x_bytes = N * H * W * Cin * x.dtype.itemsize * n_j
    halo_bytes = (N * n_h * 2 * p * W * Cin * x.dtype.itemsize * n_j) if has_strips else 0
    out_bytes = N * H * W * Cout * jnp.dtype(out_dtype).itemsize
    bytes_accessed = int(x_bytes + halo_bytes + w.size * w.dtype.itemsize
                         + b.size * 4 + out_bytes)

    out = pl.pallas_call(
        kernel,
        out_shape=jax.ShapeDtypeStruct((N, H, W, Cout), out_dtype),
        grid=(N, n_j, n_h),                  # H innermost -> weight tile stays resident
        in_specs=in_specs,
        out_specs=pl.BlockSpec((1, th, W, tn), lambda n, j, i: (n, i, 0, j)),
        scratch_shapes=[pltpu.VMEM((TH2, Wp, Cin), x.dtype),
                        pltpu.VMEM((th * W, tn), jnp.float32)],
        compiler_params=pltpu.CompilerParams(
            dimension_semantics=("parallel", "parallel", "parallel"),
            vmem_limit_bytes=_vmem_limit(need),
        ),
        cost_estimate=pl.CostEstimate(flops=flops, transcendentals=0,
                                      bytes_accessed=bytes_accessed),
    )(*operands)
    return out


# ----------------------------------------------------------------------------
# Fused tail: dilated 3x3 conv (256->128) + ReLU + 1x1 conv (128->1) epilogue.
# ----------------------------------------------------------------------------
def _head_kernel(*refs, th, W, p, dil, n_h, has_strips):
    if has_strips:
        (x_top, x_mid, x_bot, w1_ref, b1_ref, w2_ref, b2_ref,
         o_ref, win_ref, acc_ref) = refs
    else:
        x_mid, w1_ref, b1_ref, w2_ref, b2_ref, o_ref, win_ref, acc_ref = refs
        x_top = x_bot = None
    i = pl.program_id(1)
    _assemble_window(win_ref, x_top, x_mid, x_bot, i, th=th, W=W, p=p, n_h=n_h)
    _accumulate_taps(win_ref, w1_ref, acc_ref, th=th, W=W, p=p, dil=dil, fold=False)
    C1 = w1_ref.shape[-1]
    h = jnp.maximum(acc_ref[...] + b1_ref[0], 0.0)              # (th*W, C1) f32
    dens = jnp.sum(h.reshape(th, W, C1) * w2_ref[...].reshape(1, 1, C1),
                   axis=-1) + b2_ref[0, 0]
    o_ref[0] = dens.astype(o_ref.dtype)


def conv_dilated_head(x, w1, b1, w2, b2, *, dilation=2, max_th=None):
    """Fused (3x3 dilated conv + ReLU) -> (1x1 conv -> 1 channel). Returns (N,H,W) f32."""
    N, H, W, Cin = x.shape
    C1 = w1.shape[-1]
    p = dilation
    th = _pick_th(H, W, Cin, C1, p, fold=False, max_th=max_th, align8_or_full=True)
    n_h = H // th
    TH2, Wp = th + 2 * p, W + 2 * p
    has_strips = n_h > 1

    kernel = functools.partial(_head_kernel, th=th, W=W, p=p, dil=dilation,
                               n_h=n_h, has_strips=has_strips)

    mid_spec = pl.BlockSpec((1, th, W, Cin), lambda n, i: (n, i, 0, 0))
    w1_spec = pl.BlockSpec((3, 3, Cin, C1), lambda n, i: (0, 0, 0, 0))
    b1_spec = pl.BlockSpec((1, C1), lambda n, i: (0, 0))
    w2_spec = pl.BlockSpec((1, C1), lambda n, i: (0, 0))
    b2_spec = pl.BlockSpec((1, 1), lambda n, i: (0, 0))

    if has_strips:
        r_stride = th // p
        n_strip = H // p
        top_spec = pl.BlockSpec(
            (1, p, W, Cin), lambda n, i: (n, jnp.maximum(i * r_stride - 1, 0), 0, 0))
        bot_spec = pl.BlockSpec(
            (1, p, W, Cin),
            lambda n, i: (n, jnp.minimum((i + 1) * r_stride, n_strip - 1), 0, 0))
        in_specs = [top_spec, mid_spec, bot_spec, w1_spec, b1_spec, w2_spec, b2_spec]
        operands = (x, x, x, w1, b1.reshape(1, C1), w2.reshape(1, C1), b2.reshape(1, 1))
    else:
        in_specs = [mid_spec, w1_spec, b1_spec, w2_spec, b2_spec]
        operands = (x, w1, b1.reshape(1, C1), w2.reshape(1, C1), b2.reshape(1, 1))

    need = _conv_vmem_need(th, W, Cin, C1, p, False) + th * W * C1 * 4
    flops = 2 * N * H * W * (9 * Cin * C1 + C1)
    bytes_accessed = int(N * H * W * Cin * x.dtype.itemsize + w1.size * w1.dtype.itemsize
                         + C1 * 8 + 4 + N * H * W * 4)

    out = pl.pallas_call(
        kernel,
        out_shape=jax.ShapeDtypeStruct((N, H, W), jnp.float32),
        grid=(N, n_h),
        in_specs=in_specs,
        out_specs=pl.BlockSpec((1, th, W), lambda n, i: (n, i, 0)),
        scratch_shapes=[pltpu.VMEM((TH2, Wp, Cin), x.dtype),
                        pltpu.VMEM((th * W, C1), jnp.float32)],
        compiler_params=pltpu.CompilerParams(
            dimension_semantics=("parallel", "parallel"),
            vmem_limit_bytes=_vmem_limit(need),
        ),
        cost_estimate=pl.CostEstimate(flops=flops, transcendentals=0,
                                      bytes_accessed=bytes_accessed),
    )(*operands)
    return out


# ----------------------------------------------------------------------------
# Plain-JAX glue
# ----------------------------------------------------------------------------
def maxpool2x2(x):
    N, H, W, C = x.shape
    return jnp.max(x.reshape(N, H // 2, 2, W // 2, 2, C), axis=(2, 4))


# ----------------------------------------------------------------------------
# Parameter construction (deterministic He-style; eval-mode BN folded exactly)
# ----------------------------------------------------------------------------
FRONT_CFG = [64, 64, 'M', 128, 128, 'M', 256, 256, 256, 'M', 512, 512, 512]
# Matches the reference module's backend: 3x(512->512), 512->256, 256->128 dilated
# 3x3 convs (padding=dilation=2) followed by Conv2d(128, 1, 1).
BACK_CFG = [(512, 512, 3, 2, True), (512, 512, 3, 2, True), (512, 512, 3, 2, True),
            (512, 256, 3, 2, True), (256, 128, 3, 2, True), (128, 1, 1, 1, False)]


def init_csrnet_params(seed=0):
    key = jax.random.PRNGKey(seed)
    eps = 1e-5
    front_params = []
    cin = 3
    for v in FRONT_CFG:
        if v == 'M':
            continue
        cout = v
        key, k1, k2, k3, k4, k5, k6 = jax.random.split(key, 7)
        std = (2.0 / (cin * 9)) ** 0.5
        w = jax.random.normal(k1, (cout, cin, 3, 3), jnp.float32) * std      # OIHW
        b = jax.random.normal(k2, (cout,), jnp.float32) * 0.01
        gamma = 1.0 + 0.1 * jax.random.normal(k3, (cout,), jnp.float32)
        beta = 0.01 * jax.random.normal(k4, (cout,), jnp.float32)
        rmean = 0.01 * jax.random.normal(k5, (cout,), jnp.float32)
        rvar = 1.0 + 0.1 * jax.random.uniform(k6, (cout,), jnp.float32)
        scale = gamma / jnp.sqrt(rvar + eps)            # fold eval-mode BN: exact
        w = w * scale[:, None, None, None]
        b = (b - rmean) * scale + beta
        front_params.append((jnp.transpose(w, (2, 3, 1, 0)).astype(jnp.bfloat16),
                             b.astype(jnp.float32)))    # HWIO bf16, f32 bias
        cin = cout

    back_params = []
    for idx, (ci, co, k, _dil, _relu) in enumerate(BACK_CFG):
        key, k1, k2 = jax.random.split(key, 3)
        std = (2.0 / (ci * k * k)) ** 0.5
        w = jax.random.normal(k1, (co, ci, k, k), jnp.float32) * std          # OIHW
        b = jax.random.normal(k2, (co,), jnp.float32) * 0.01
        w_hwio = jnp.transpose(w, (2, 3, 1, 0))
        if idx < len(BACK_CFG) - 1:
            w_hwio = w_hwio.astype(jnp.bfloat16)        # final 1x1 head stays f32
        back_params.append((w_hwio, b))
    return front_params, back_params


# ----------------------------------------------------------------------------
# Forward pass (same semantics as CSRNet.forward)
# ----------------------------------------------------------------------------
def csrnet_forward(x_nchw, front_params, back_params):
    x = jnp.transpose(x_nchw, (0, 2, 3, 1)).astype(jnp.bfloat16)   # NCHW -> NHWC bf16
    # --- frontend: vgg16_bn features[:33] with folded BN ---
    ci = 0
    for v in FRONT_CFG:
        if v == 'M':
            x = maxpool2x2(x)
        else:
            w, b = front_params[ci]
            x = conv2d(x, w, b, dilation=1, relu=True)
            ci += 1
    # --- backend: dilated convs ---
    for i in range(4):
        w, b = back_params[i]
        x = conv2d(x, w, b, dilation=2, relu=True)
    # fused (256->128 dilated conv + ReLU) + (1x1 conv -> 1 channel)
    w4, b4 = back_params[4]
    w5, b5 = back_params[5]
    dens = conv_dilated_head(x, w4, b4, w5.reshape(-1), b5, dilation=2)
    return dens[:, None, :, :].astype(jnp.float32)      # (N, 1, H/8, W/8)


# ----------------------------------------------------------------------------
# Pure-XLA reference (same dtype flow as the kernels) for self-checking
# ----------------------------------------------------------------------------
def _conv_ref(x, w, b, *, dilation=1, relu=True):
    d = dilation
    y = jax.lax.conv_general_dilated(
        x.astype(jnp.bfloat16), w.astype(jnp.bfloat16), window_strides=(1, 1),
        padding=((d, d), (d, d)), rhs_dilation=(d, d),
        dimension_numbers=("NHWC", "HWIO", "NHWC"),
        preferred_element_type=jnp.float32)
    y = y + b.astype(jnp.float32)
    if relu:
        y = jnp.maximum(y, 0.0)
    return y


def csrnet_reference(x_nchw, front_params, back_params):
    x = jnp.transpose(x_nchw, (0, 2, 3, 1)).astype(jnp.bfloat16)
    ci = 0
    for v in FRONT_CFG:
        if v == 'M':
            x = maxpool2x2(x)
        else:
            w, b = front_params[ci]
            x = _conv_ref(x, w, b, dilation=1, relu=True).astype(jnp.bfloat16)
            ci += 1
    for i in range(4):
        w, b = back_params[i]
        x = _conv_ref(x, w, b, dilation=2, relu=True).astype(jnp.bfloat16)
    w4, b4 = back_params[4]
    w5, b5 = back_params[5]
    h = _conv_ref(x, w4, b4, dilation=2, relu=True)                 # f32
    dens = jnp.einsum("nhwc,c->nhw", h, w5.reshape(-1).astype(jnp.float32)) + b5[0]
    return dens[:, None, :, :].astype(jnp.float32)


def _max_rel_err(a, b):
    a = jnp.asarray(a, jnp.float32)
    b = jnp.asarray(b, jnp.float32)
    scale = jnp.maximum(jnp.max(jnp.abs(b)), 1.0)
    return float(jnp.max(jnp.abs(a - b)) / scale)


if __name__ == "__main__":
    front_params, back_params = init_csrnet_params(seed=0)
    key = jax.random.PRNGKey(0)
    x = jax.random.normal(key, (2, 3, 32, 32), jnp.float32)

    # --- unit tests of the generic conv: force multi-H-tile halo path (n_h=3) ---
    k1, k2, k3, k4 = jax.random.split(key, 4)
    xt = jax.random.normal(k1, (1, 24, 16, 64), jnp.float32).astype(jnp.bfloat16)
    wt = (jax.random.normal(k2, (3, 3, 64, 128), jnp.float32) * 0.05).astype(jnp.bfloat16)
    bt = jax.random.normal(k3, (128,), jnp.float32) * 0.1
    y_pl = conv2d(xt, wt, bt, dilation=2, relu=True, max_th=8)       # folded-K path
    y_rf = _conv_ref(xt, wt, bt, dilation=2, relu=True)
    assert _max_rel_err(y_pl, y_rf) < 2e-2, "folded-K conv mismatch"

    xt2 = jax.random.normal(k4, (1, 24, 16, 256), jnp.float32).astype(jnp.bfloat16)
    wt2 = (jax.random.normal(k2, (3, 3, 256, 128), jnp.float32) * 0.02).astype(jnp.bfloat16)
    y_pl2 = conv2d(xt2, wt2, bt, dilation=1, relu=True, max_th=8)    # 9-tap path
    y_rf2 = _conv_ref(xt2, wt2, bt, dilation=1, relu=True)
    assert _max_rel_err(y_pl2, y_rf2) < 2e-2, "9-tap conv mismatch"

    # --- full CSRNet forward ---
    fwd = jax.jit(csrnet_forward)
    out = jax.block_until_ready(fwd(x, front_params, back_params))

    # CSRNet output: 1-channel density map at 1/8 spatial resolution
    assert out.shape == (2, 1, 4, 4), out.shape
    assert out.dtype == jnp.float32
    assert bool(jnp.all(jnp.isfinite(out)))

    ref = csrnet_reference(x, front_params, back_params)
    assert _max_rel_err(out, ref) < 6e-2, "CSRNet forward mismatch vs XLA reference"

    print("KERNEL_OK")
</pallas_src>

<mosaic_0001>
module attributes {stable_mosaic.version = 11 : i64} {
  func.func @_conv_kernel(%arg0: i32, %arg1: i32, %arg2: i32, %arg3: memref<1x2x16x64xbf16, #tpu.memory_space<vmem>>, %arg4: memref<1x8x16x64xbf16, #tpu.memory_space<vmem>>, %arg5: memref<1x2x16x64xbf16, #tpu.memory_space<vmem>>, %arg6: memref<3x192x128xbf16, #tpu.memory_space<vmem>>, %arg7: memref<1x128xf32, #tpu.memory_space<vmem>>, %arg8: memref<1x8x16x128xbf16, #tpu.memory_space<vmem>>, %arg9: memref<12x20x64xbf16, #tpu.memory_space<vmem>>, %arg10: memref<128x128xf32, #tpu.memory_space<vmem>>) attributes {dimension_semantics = [#tpu.dimension_semantics<parallel>, #tpu.dimension_semantics<parallel>, #tpu.dimension_semantics<parallel>], iteration_bounds = array<i64: 1, 1, 3>, scalar_prefetch = 0 : i64, scratch_operands = 2 : i64, tpu.core_type = #tpu.core_type<tc>, window_params = [{transform_indices = @transform_0, window_bounds = array<i64: 1, 2, 16, 64>}, {transform_indices = @transform_1, window_bounds = array<i64: 1, 8, 16, 64>}, {transform_indices = @transform_2, window_bounds = array<i64: 1, 2, 16, 64>}, {transform_indices = @transform_3, window_bounds = array<i64: 3, 192, 128>}, {transform_indices = @transform_4, window_bounds = array<i64: 1, 128>}, {transform_indices = @transform_5, window_bounds = array<i64: 1, 8, 16, 128>}]} {
    %cst = arith.constant 0.000000e+00 : bf16
    %0 = vector.broadcast %cst : bf16 to vector<12x2x64xbf16>
    %c0 = arith.constant 0 : index
    %c0_0 = arith.constant 0 : index
    %c0_1 = arith.constant 0 : index
    %1 = vector.load %arg9[%c0, %c0_0, %c0_1] : memref<12x20x64xbf16, #tpu.memory_space<vmem>>, vector<12x2x64xbf16>
    tpu.vector_store %arg9[%c0, %c0_0, %c0_1], %0 {strides = array<i32>} : memref<12x20x64xbf16, #tpu.memory_space<vmem>>, vector<12x2x64xbf16>,
    %c0_2 = arith.constant 0 : index
    %c18 = arith.constant 18 : index
    %c0_3 = arith.constant 0 : index
    %2 = vector.load %arg9[%c0_2, %c18, %c0_3] : memref<12x20x64xbf16, #tpu.memory_space<vmem>>, vector<12x2x64xbf16>
    tpu.vector_store %arg9[%c0_2, %c18, %c0_3], %0 {strides = array<i32>} : memref<12x20x64xbf16, #tpu.memory_space<vmem>>, vector<12x2x64xbf16>,
    %c0_4 = arith.constant 0 : index
    %c0_5 = arith.constant 0 : index
    %c0_6 = arith.constant 0 : index
    %c0_7 = arith.constant 0 : index
    %3 = vector.load %arg3[%c0_4, %c0_5, %c0_6, %c0_7] : memref<1x2x16x64xbf16, #tpu.memory_space<vmem>>, vector<1x2x16x64xbf16>
    %4 = vector.shape_cast %3 : vector<1x2x16x64xbf16> to vector<2x16x64xbf16>
    %c0_i32 = arith.constant 0 : i32
    %5 = arith.cmpi sgt, %arg2, %c0_i32 : i32
    %6 = arith.extui %5 : i1 to i32
    %7 = arith.sitofp %6 : i32 to f32
    %8 = arith.truncf %7 : f32 to bf16
    %9 = vector.broadcast %8 : bf16 to vector<2x16x64xbf16>
    %10 = arith.mulf %4, %9 : vector<2x16x64xbf16>
    %c0_8 = arith.constant 0 : index
    %c2 = arith.constant 2 : index
    %c0_9 = arith.constant 0 : index
    %11 = vector.load %arg9[%c0_8, %c2, %c0_9] : memref<12x20x64xbf16, #tpu.memory_space<vmem>>, vector<2x16x64xbf16>
    tpu.vector_store %arg9[%c0_8, %c2, %c0_9], %10 {strides = array<i32>} : memref<12x20x64xbf16, #tpu.memory_space<vmem>>, vector<2x16x64xbf16>,
    %c0_10 = arith.constant 0 : index
    %c0_11 = arith.constant 0 : index
    %c0_12 = arith.constant 0 : index
    %c0_13 = arith.constant 0 : index
    %12 = vector.load %arg5[%c0_10, %c0_11, %c0_12, %c0_13] : memref<1x2x16x64xbf16, #tpu.memory_space<vmem>>, vector<1x2x16x64xbf16>
    %13 = vector.shape_cast %12 : vector<1x2x16x64xbf16> to vector<2x16x64xbf16>
    %c2_i32 = arith.constant 2 : i32
    %14 = arith.cmpi slt, %arg2, %c2_i32 : i32
    %15 = arith.extui %14 : i1 to i32
    %16 = arith.sitofp %15 : i32 to f32
    %17 = arith.truncf %16 : f32 to bf16
    %18 = vector.broadcast %17 : bf16 to vector<2x16x64xbf16>
    %19 = arith.mulf %13, %18 : vector<2x16x64xbf16>
    %c10 = arith.constant 10 : index
    %c2_14 = arith.constant 2 : index
    %c0_15 = arith.constant 0 : index
    %20 = vector.load %arg9[%c10, %c2_14, %c0_15] : memref<12x20x64xbf16, #tpu.memory_space<vmem>>, vector<2x16x64xbf16>
    tpu.vector_store %arg9[%c10, %c2_14, %c0_15], %19 {strides = array<i32>} : memref<12x20x64xbf16, #tpu.memory_space<vmem>>, vector<2x16x64xbf16>,
    %c0_16 = arith.constant 0 : index
    %c0_17 = arith.constant 0 : index
    %c0_18 = arith.constant 0 : index
    %c0_19 = arith.constant 0 : index
    %21 = vector.load %arg4[%c0_16, %c0_17, %c0_18, %c0_19] : memref<1x8x16x64xbf16, #tpu.memory_space<vmem>>, vector<1x8x16x64xbf16>
    %22 = vector.shape_cast %21 : vector<1x8x16x64xbf16> to vector<8x16x64xbf16>
    %c2_20 = arith.constant 2 : index
    %c2_21 = arith.constant 2 : index
    %c0_22 = arith.constant 0 : index
    %23 = vector.load %arg9[%c2_20, %c2_21, %c0_22] : memref<12x20x64xbf16, #tpu.memory_space<vmem>>, vector<8x16x64xbf16>
    tpu.vector_store %arg9[%c2_20, %c2_21, %c0_22], %22 {strides = array<i32>} : memref<12x20x64xbf16, #tpu.memory_space<vmem>>, vector<8x16x64xbf16>,
    %c0_23 = arith.constant 0 : index
    %c0_24 = arith.constant 0 : index
    %c0_25 = arith.constant 0 : index
    %24 = vector.load %arg9[%c0_23, %c0_24, %c0_25] : memref<12x20x64xbf16, #tpu.memory_space<vmem>>, vector<8x20x64xbf16>
    %25 = vector.extract_strided_slice %24 {offsets = [0, 0, 0], sizes = [8, 16, 64], strides = [1, 1, 1]} : vector<8x20x64xbf16> to vector<8x16x64xbf16>
    %26 = vector.extract_strided_slice %24 {offsets = [0, 2, 0], sizes = [8, 16, 64], strides = [1, 1, 1]} : vector<8x20x64xbf16> to vector<8x16x64xbf16>
    %27 = vector.extract_strided_slice %24 {offsets = [0, 4, 0], sizes = [8, 16, 64], strides = [1, 1, 1]} : vector<8x20x64xbf16> to vector<8x16x64xbf16>
    %28 = tpu.concatenate %25, %26, %27 in 2 : vector<8x16x64xbf16>, vector<8x16x64xbf16>, vector<8x16x64xbf16> -> vector<8x16x192xbf16>
    %29 = vector.shape_cast %28 : vector<8x16x192xbf16> to vector<128x192xbf16>
    %c0_26 = arith.constant 0 : index
    %c0_27 = arith.constant 0 : index
    %c0_28 = arith.constant 0 : index
    %30 = vector.load %arg6[%c0_26, %c0_27, %c0_28] : memref<3x192x128xbf16, #tpu.memory_space<vmem>>, vector<1x192x128xbf16>
    %31 = vector.shape_cast %30 : vector<1x192x128xbf16> to vector<192x128xbf16>
    %cst_29 = arith.constant dense<0.000000e+00> : vector<128x128xf32>
    %32 = tpu.matmul %29, %31, %cst_29 {dimension_numbers = #tpu.dot_dimension_numbers<[1], [0], [0], [1], [0, 0, 1, 1], [], []>} : vector<128x192xbf16>, vector<192x128xbf16>, vector<128x128xf32> -> vector<128x128xf32>
    %c0_30 = arith.constant 0 : index
    %c0_31 = arith.constant 0 : index
    %33 = vector.load %arg10[%c0_30, %c0_31] : memref<128x128xf32, #tpu.memory_space<vmem>>, vector<128x128xf32>
    tpu.vector_store %arg10[%c0_30, %c0_31], %32 {strides = array<i32>} : memref<128x128xf32, #tpu.memory_space<vmem>>, vector<128x128xf32>,
    %c2_32 = arith.constant 2 : index
    %c0_33 = arith.constant 0 : index
    %c0_34 = arith.constant 0 : index
    %34 = vector.load %arg9[%c2_32, %c0_33, %c0_34] : memref<12x20x64xbf16, #tpu.memory_space<vmem>>, vector<8x20x64xbf16>
    %35 = vector.extract_strided_slice %34 {offsets = [0, 0, 0], sizes = [8, 16, 64], strides = [1, 1, 1]} : vector<8x20x64xbf16> to vector<8x16x64xbf16>
    %36 = vector.extract_strided_slice %34 {offsets = [0, 2, 0], sizes = [8, 16, 64], strides = [1, 1, 1]} : vector<8x20x64xbf16> to vector<8x16x64xbf16>
    %37 = vector.extract_strided_slice %34 {offsets = [0, 4, 0], sizes = [8, 16, 64], strides = [1, 1, 1]} : vector<8x20x64xbf16> to vector<8x16x64xbf16>
    %38 = tpu.concatenate %35, %36, %37 in 2 : vector<8x16x64xbf16>, vector<8x16x64xbf16>, vector<8x16x64xbf16> -> vector<8x16x192xbf16>
    %39 = vector.shape_cast %38 : vector<8x16x192xbf16> to vector<128x192xbf16>
    %c1 = arith.constant 1 : index
    %c0_35 = arith.constant 0 : index
    %c0_36 = arith.constant 0 : index
    %40 = vector.load %arg6[%c1, %c0_35, %c0_36] : memref<3x192x128xbf16, #tpu.memory_space<vmem>>, vector<1x192x128xbf16>
    %41 = vector.shape_cast %40 : vector<1x192x128xbf16> to vector<192x128xbf16>
    %cst_37 = arith.constant dense<0.000000e+00> : vector<128x128xf32>
    %42 = tpu.matmul %39, %41, %cst_37 {dimension_numbers = #tpu.dot_dimension_numbers<[1], [0], [0], [1], [0, 0, 1, 1], [], []>} : vector<128x192xbf16>, vector<192x128xbf16>, vector<128x128xf32> -> vector<128x128xf32>
    %c0_38 = arith.constant 0 : index
    %c0_39 = arith.constant 0 : index
    %43 = vector.load %arg10[%c0_38, %c0_39] : memref<128x128xf32, #tpu.memory_space<vmem>>, vector<128x128xf32>
    %44 = arith.addf %43, %42 : vector<128x128xf32>
    %c0_40 = arith.constant 0 : index
    %c0_41 = arith.constant 0 : index
    %45 = vector.load %arg10[%c0_40, %c0_41] : memref<128x128xf32, #tpu.memory_space<vmem>>, vector<128x128xf32>
    tpu.vector_store %arg10[%c0_40, %c0_41], %44 {strides = array<i32>} : memref<128x128xf32, #tpu.memory_space<vmem>>, vector<128x128xf32>,
    %c4 = arith.constant 4 : index
    %c0_42 = arith.constant 0 : index
    %c0_43 = arith.constant 0 : index
    %46 = vector.load %arg9[%c4, %c0_42, %c0_43] : memref<12x20x64xbf16, #tpu.memory_space<vmem>>, vector<8x20x64xbf16>
    %47 = vector.extract_strided_slice %46 {offsets = [0, 0, 0], sizes = [8, 16, 64], strides = [1, 1, 1]} : vector<8x20x64xbf16> to vector<8x16x64xbf16>
    %48 = vector.extract_strided_slice %46 {offsets = [0, 2, 0], sizes = [8, 16, 64], strides = [1, 1, 1]} : vector<8x20x64xbf16> to vector<8x16x64xbf16>
    %49 = vector.extract_strided_slice %46 {offsets = [0, 4, 0], sizes = [8, 16, 64], strides = [1, 1, 1]} : vector<8x20x64xbf16> to vector<8x16x64xbf16>
    %50 = tpu.concatenate %47, %48, %49 in 2 : vector<8x16x64xbf16>, vector<8x16x64xbf16>, vector<8x16x64xbf16> -> vector<8x16x192xbf16>
    %51 = vector.shape_cast %50 : vector<8x16x192xbf16> to vector<128x192xbf16>
    %c2_44 = arith.constant 2 : index
    %c0_45 = arith.constant 0 : index
    %c0_46 = arith.constant 0 : index
    %52 = vector.load %arg6[%c2_44, %c0_45, %c0_46] : memref<3x192x128xbf16, #tpu.memory_space<vmem>>, vector<1x192x128xbf16>
    %53 = vector.shape_cast %52 : vector<1x192x128xbf16> to vector<192x128xbf16>
    %cst_47 = arith.constant dense<0.000000e+00> : vector<128x128xf32>
    %54 = tpu.matmul %51, %53, %cst_47 {dimension_numbers = #tpu.dot_dimension_numbers<[1], [0], [0], [1], [0, 0, 1, 1], [], []>} : vector<128x192xbf16>, vector<192x128xbf16>, vector<128x128xf32> -> vector<128x128xf32>
    %c0_48 = arith.constant 0 : index
    %c0_49 = arith.constant 0 : index
    %55 = vector.load %arg10[%c0_48, %c0_49] : memref<128x128xf32, #tpu.memory_space<vmem>>, vector<128x128xf32>
    %56 = arith.addf %55, %54 : vector<128x128xf32>
    %c0_50 = arith.constant 0 : index
    %c0_51 = arith.constant 0 : index
    %57 = vector.load %arg10[%c0_50, %c0_51] : memref<128x128xf32, #tpu.memory_space<vmem>>, vector<128x128xf32>
    tpu.vector_store %arg10[%c0_50, %c0_51], %56 {strides = array<i32>} : memref<128x128xf32, #tpu.memory_space<vmem>>, vector<128x128xf32>,
    %c0_52 = arith.constant 0 : index
    %c0_53 = arith.constant 0 : index
    %58 = vector.load %arg10[%c0_52, %c0_53] : memref<128x128xf32, #tpu.memory_space<vmem>>, vector<128x128xf32>
    %c0_54 = arith.constant 0 : index
    %c0_55 = arith.constant 0 : index
    %59 = vector.load %arg7[%c0_54, %c0_55] : memref<1x128xf32, #tpu.memory_space<vmem>>, vector<1x128xf32>
    %60 = vector.shape_cast %59 : vector<1x128xf32> to vector<128xf32>
    %61 = vector.shape_cast %60 : vector<128xf32> to vector<1x128xf32>
    %62 = vector.broadcast %61 : vector<1x128xf32> to vector<128x128xf32>
    %63 = arith.addf %58, %62 : vector<128x128xf32>
    %cst_56 = arith.constant 0.000000e+00 : f32
    %64 = vector.broadcast %cst_56 : f32 to vector<128x128xf32>
    %65 = arith.maximumf %63, %64 : vector<128x128xf32>
    %66 = vector.shape_cast %65 : vector<128x128xf32> to vector<8x16x128xf32>
    %67 = arith.truncf %66 : vector<8x16x128xf32> to vector<8x16x128xbf16>
    %c0_57 = arith.constant 0 : index
    %c0_58 = arith.constant 0 : index
    %c0_59 = arith.constant 0 : index
    %c0_60 = arith.constant 0 : index
    %68 = vector.load %arg8[%c0_57, %c0_58, %c0_59, %c0_60] : memref<1x8x16x128xbf16, #tpu.memory_space<vmem>>, vector<1x8x16x128xbf16>
    %69 = vector.shape_cast %68 : vector<1x8x16x128xbf16> to vector<8x16x128xbf16>
    %70 = vector.shape_cast %67 : vector<8x16x128xbf16> to vector<1x8x16x128xbf16>
    tpu.vector_store %arg8[%c0_57, %c0_58, %c0_59, %c0_60], %70 {strides = array<i32>} : memref<1x8x16x128xbf16, #tpu.memory_space<vmem>>, vector<1x8x16x128xbf16>,
    return
  }
  func.func @transform_0(%arg0: i32, %arg1: i32, %arg2: i32) -> (i32, i32, i32, i32) {
    %c4_i32 = arith.constant 4 : i32
    %0 = arith.muli %arg2, %c4_i32 : i32
    %c1_i32 = arith.constant 1 : i32
    %1 = arith.subi %0, %c1_i32 : i32
    %c0_i32 = arith.constant 0 : i32
    %2 = arith.maxsi %1, %c0_i32 : i32
    %c0_i32_0 = arith.constant 0 : i32
    %c0_i32_1 = arith.constant 0 : i32
    %c0_i32_2 = arith.constant 0 : i32
    return %arg0, %2, %c0_i32_0, %c0_i32_1 : i32, i32, i32, i32
  }
  func.func @transform_1(%arg0: i32, %arg1: i32, %arg2: i32) -> (i32, i32, i32, i32) {
    %c0_i32 = arith.constant 0 : i32
    %c0_i32_0 = arith.constant 0 : i32
    %c0_i32_1 = arith.constant 0 : i32
    return %arg0, %arg2, %c0_i32, %c0_i32_0 : i32, i32, i32, i32
  }
  func.func @transform_2(%arg0: i32, %arg1: i32, %arg2: i32) -> (i32, i32, i32, i32) {
    %c1_i32 = arith.constant 1 : i32
    %0 = arith.addi %arg2, %c1_i32 : i32
    %c4_i32 = arith.constant 4 : i32
    %1 = arith.muli %0, %c4_i32 : i32
    %c11_i32 = arith.constant 11 : i32
    %2 = arith.minsi %1, %c11_i32 : i32
    %c0_i32 = arith.constant 0 : i32
    %c0_i32_0 = arith.constant 0 : i32
    %c0_i32_1 = arith.constant 0 : i32
    return %arg0, %2, %c0_i32, %c0_i32_0 : i32, i32, i32, i32
  }
  func.func @transform_3(%arg0: i32, %arg1: i32, %arg2: i32) -> (i32, i32, i32) {
    %c0_i32 = arith.constant 0 : i32
    %c0_i32_0 = arith.constant 0 : i32
    %c0_i32_1 = arith.constant 0 : i32
    return %c0_i32, %c0_i32_0, %arg1 : i32, i32, i32
  }
  func.func @transform_4(%arg0: i32, %arg1: i32, %arg2: i32) -> (i32, i32) {
    %c0_i32 = arith.constant 0 : i32
    %c0_i32_0 = arith.constant 0 : i32
    return %c0_i32, %arg1 : i32, i32
  }
  func.func @transform_5(%arg0: i32, %arg1: i32, %arg2: i32) -> (i32, i32, i32, i32) {
    %c0_i32 = arith.constant 0 : i32
    %c0_i32_0 = arith.constant 0 : i32
    return %arg0, %arg2, %c0_i32, %arg1 : i32, i32, i32, i32
  }
}

</mosaic_0001>

<llo_original>
// kernel: tpu_custom_call.1
$region0: #{tpu_custom_call.1}
  #allocation0 [shape = 'u32[]', space=smem, size = 0x4, offset = 0x4, fixed_abs, tag = 'smem constant byte address 0x4 - core index']
  #allocation1 [shape = 'u32[72,128]{1,0:T(1,128)}', space=vmem, size = 0x9000, scoped, tag = 'internal scratch']
  #allocation2 [shape = 'bf16[12,20,64]{2,1,0:T(8,128)(2,1)}', space=vmem, size = 0x12000, scoped, tag = 'scratch operand']
  #allocation3 [shape = 'f32[128,128]{1,0:T(8,128)}', space=vmem, size = 0x10000, scoped, tag = 'scratch operand']
  %s0 = inlined_call_operand.hbm [shape: bf16[1,24,16,64], index: 0, kind: input, shape index: {}]
  %s1 = inlined_call_operand.hbm [shape: bf16[1,24,16,64], index: 1, kind: input, shape index: {}]
  %s2 = inlined_call_operand.hbm [shape: bf16[1,24,16,64], index: 2, kind: input, shape index: {}]
  %s3 = inlined_call_operand.hbm [shape: bf16[3,192,128], index: 3, kind: input, shape index: {}]
  %s4 = inlined_call_operand.vmem [shape: f32[1,128], index: 4, kind: input, shape index: {}]
  %s5 = inlined_call_operand.hbm [shape: bf16[1,24,16,128], index: 5, kind: output, shape index: {}]
  %s6 = sld [smem:[#allocation0]]
  $region69: #{tpu_custom_call.1} parent=0
    _
  %s8 = ssub.s32 1, %s6
  %s9 = scalar_select 0, %s8, %s6
  $region1: #{tpu_custom_call.1} parent=0
    #allocation4 [shape = 'u8[16384]{0}', space=vmem, size = 0x4000, scoped, tag = 'input window, operand 0']
    #allocation5 [shape = 's32[2]{0}', space=sflag, size = 0x8, scoped, tag = 'scoped memory for tpu_custom_call.1']
    #allocation6 [shape = 's32[2]{0}', space=sflag, size = 0x8, scoped, tag = 'scoped memory for tpu_custom_call.1']
    #allocation7 [shape = 'u8[65536]{0}', space=vmem, size = 0x10000, scoped, tag = 'input window, operand 1']
    #allocation8 [shape = 's32[2]{0}', space=sflag, size = 0x8, scoped, tag = 'scoped memory for tpu_custom_call.1']
    #allocation9 [shape = 'u8[16384]{0}', space=vmem, size = 0x4000, scoped, tag = 'input window, operand 2']
    #allocation10 [shape = 'u8[147456]{0}', space=vmem, size = 0x24000, scoped, tag = 'input window, operand 3, single buffered']
    #allocation11 [shape = 's32[1]{0}', space=sflag, size = 0x4, scoped, tag = 'scoped memory for tpu_custom_call.1']
    #allocation12 [shape = 'u8[65536]{0}', space=vmem, size = 0x10000, scoped, tag = 'output window, operand 0']
    %10 = vsyncpa [#allocation5], 0
    %s11 = scalar_lea.sflag [#allocation5], 1
    %12 = vsyncpa %s11, 0
    %13 = vsyncpa [#allocation8], 0
    %s14 = scalar_lea.sflag [#allocation8], 1
    %15 = vsyncpa %s14, 0
    %16 = vsyncpa [#allocation11], 0
    %17 = vsyncpa [#allocation6], 0
    %s18 = scalar_lea.sflag [#allocation6], 1
    %19 = vsyncpa %s18, 0
    loop: start=0, step=1, limit=5
    $region2: #{tpu_custom_call.1} parent=1 // loop_pre_header
      _
    $region3: #{tpu_custom_call.1} parent=1 // loop_header
      %s21 = sphi 0, %s25
      %p22 = scmp.ge.s32.totalorder %s21, 5
      %s28 = sphi 0, %s47
      %s29 = sphi 0, %s43
      %s30 = sphi 0, %s39
      %s31 = sphi 0, %s28
      %s32 = sphi 0, %s29
      %s33 = sphi 0, %s30
      %s34 = sphi 0, %s31
      %s35 = sphi 0, %s32
      %s36 = sphi 0, %s33
      %s60 = sphi 0, %s62
      %s63 = sphi 0, %s60
      %s64 = sphi 0, %s63
      %s80 = sphi 0, %s64
      %s88 = sphi 0, %s90
      %s91 = sphi 0, %s88
      %s92 = sphi 0, %s91
      %s108 = sphi 0, %s92
      %s124 = sphi 0, %s126
      %s127 = sphi 0, %s124
      %s128 = sphi 0, %s127
      %s144 = sphi 0, %s128
      %s150 = sphi 0, %s152
      %s153 = sphi 0, %s150
      %s154 = sphi 0, %s153
      %s170 = sphi 0, %s154
      %s176 = sphi 0, %s178
      %s179 = sphi 0, %s176
      %s180 = sphi 0, %s179
      %s196 = sphi 0, %s180
      %s206 = sphi 0, %s208
      %s209 = sphi 0, %s206
      %s210 = sphi 0, %s209
      %s226 = sphi 0, %s210
    $region4: #{tpu_custom_call.1} parent=1 // loop_header_branch
      %24 = sbr.rel (%p22) target = $region8
    $region5: #{tpu_custom_call.1} parent=1 // loop_body
      %s26 = ssub.s32 %s21, 1
      %s27 = ssub.s32 %s21, 2
      %s37 = sadd.s32 1, %s30
      %p38 = scmp.ge.s32.totalorder %s37, 3
      %s39 = scalar_select %p38, 0, %s37
      %s40 = sadd.s32 1, %s29
      %s41 = scalar_select %p38, %s40, %s29
      %p42 = scmp.ge.s32.totalorder %s41, 1
      %s43 = scalar_select %p42, 0, %s41
      %s44 = sadd.s32 1, %s28
      %s45 = scalar_select %p42, %s44, %s28
      %p46 = scmp.ge.s32.totalorder %s45, 1
      %s47 = scalar_select %p46, 0, %s45
      %s48 = smul.u32 %s30, 4
      %s49 = ssub.s32 %s48, 1
      %p50 = scmp.gt.s32.totalorder %s49, 0
      %s51 = scalar_select %p50, %s49, 0
      %s52 = smul.u32 %s39, 4
      %s53 = ssub.s32 %s52, 1
      %p54 = scmp.gt.s32.totalorder %s53, 0
      %s55 = scalar_select %p54, %s53, 0
      %s56 = ssub.s32 %s28, %s47
      %s57 = ssub.s32 %s51, %s55
      %s58 = sor.u32 %s56, %s57
      %p59 = scmp.eq.s32.totalorder %s58, 0
      %s61 = sadd.s32 %s60, 1
      %s62 = scalar_select %p59, %s60, %s61
      %p65 = pneg %p59
      %p66 = scmp.eq.s32.totalorder %s21, 2
      %p67 = por %p65, %p66
      %p68 = scmp.ne.s32.totalorder %s60, %s63
      %p69 = scmp.eq.s32.totalorder %s21, 0
      %p70 = por %p68, %p69
      %p71 = scmp.ne.s32.totalorder %s60, %s63
      %p72 = scmp.eq.s32.totalorder %s26, 2
      %p73 = por %p71, %p72
      %p74 = scmp.ne.s32.totalorder %s63, %s64
      %p75 = scmp.eq.s32.totalorder %s26, 0
      %p76 = por %p74, %p75
      %p77 = scmp.ne.s32.totalorder %s63, %s64
      %p78 = scmp.eq.s32.totalorder %s27, 2
      %p79 = por %p77, %p78
      %p81 = scmp.ne.s32.totalorder %s64, %s80
      %p82 = scmp.eq.s32.totalorder %s27, 0
      %p83 = por %p81, %p82
      %s84 = ssub.s32 %s28, %s47
      %s85 = ssub.s32 %s30, %s39
      %s86 = sor.u32 %s84, %s85
      %p87 = scmp.eq.s32.totalorder %s86, 0
      %s89 = sadd.s32 %s88, 1
      %s90 = scalar_select %p87, %s88, %s89
      %p93 = pneg %p87
      %p94 = scmp.eq.s32.totalorder %s21, 2
      %p95 = por %p93, %p94
      %p96 = scmp.ne.s32.totalorder %s88, %s91
      %p97 = scmp.eq.s32.totalorder %s21, 0
      %p98 = por %p96, %p97
      %p99 = scmp.ne.s32.totalorder %s88, %s91
      %p100 = scmp.eq.s32.totalorder %s26, 2
      %p101 = por %p99, %p100
      %p102 = scmp.ne.s32.totalorder %s91, %s92
      %p103 = scmp.eq.s32.totalorder %s26, 0
      %p104 = por %p102, %p103
      %p105 = scmp.ne.s32.totalorder %s91, %s92
      %p106 = scmp.eq.s32.totalorder %s27, 2
      %p107 = por %p105, %p106
      %p109 = scmp.ne.s32.totalorder %s92, %s108
      %p110 = scmp.eq.s32.totalorder %s27, 0
      %p111 = por %p109, %p110
      %s112 = sadd.s32 %s30, 1
      %s113 = smul.u32 %s112, 4
      %p114 = scmp.lt.s32.totalorder %s113, 11
      %s115 = scalar_select %p114, %s113, 11
      %s116 = sadd.s32 %s39, 1
      %s117 = smul.u32 %s116, 4
      %p118 = scmp.lt.s32.totalorder %s117, 11
      %s119 = scalar_select %p118, %s117, 11
      %s120 = ssub.s32 %s28, %s47
      %s121 = ssub.s32 %s115, %s119
      %s122 = sor.u32 %s120, %s121
      %p123 = scmp.eq.s32.totalorder %s122, 0
      %s125 = sadd.s32 %s124, 1
      %s126 = scalar_select %p123, %s124, %s125
      %p129 = pneg %p123
      %p130 = scmp.eq.s32.totalorder %s21, 2
      %p131 = por %p129, %p130
      %p132 = scmp.ne.s32.totalorder %s124, %s127
      %p133 = scmp.eq.s32.totalorder %s21, 0
      %p134 = por %p132, %p133
      %p135 = scmp.ne.s32.totalorder %s124, %s127
      %p136 = scmp.eq.s32.totalorder %s26, 2
      %p137 = por %p135, %p136
      %p138 = scmp.ne.s32.totalorder %s127, %s128
      %p139 = scmp.eq.s32.totalorder %s26, 0
      %p140 = por %p138, %p139
      %p141 = scmp.ne.s32.totalorder %s127, %s128
      %p142 = scmp.eq.s32.totalorder %s27, 2
      %p143 = por %p141, %p142
      %p145 = scmp.ne.s32.totalorder %s128, %s144
      %p146 = scmp.eq.s32.totalorder %s27, 0
      %p147 = por %p145, %p146
      %s148 = ssub.s32 %s29, %s43
      %p149 = scmp.eq.s32.totalorder %s148, 0
      %s151 = sadd.s32 %s150, 1
      %s152 = scalar_select %p149, %s150, %s151
      %p155 = pneg %p149
      %p156 = scmp.eq.s32.totalorder %s21, 2
      %p157 = por %p155, %p156
      %p158 = scmp.ne.s32.totalorder %s150, %s153
      %p159 = scmp.eq.s32.totalorder %s21, 0
      %p160 = por %p158, %p159
      %p161 = scmp.ne.s32.totalorder %s150, %s153
      %p162 = scmp.eq.s32.totalorder %s26, 2
      %p163 = por %p161, %p162
      %p164 = scmp.ne.s32.totalorder %s153, %s154
      %p165 = scmp.eq.s32.totalorder %s26, 0
      %p166 = por %p164, %p165
      %p167 = scmp.ne.s32.totalorder %s153, %s154
      %p168 = scmp.eq.s32.totalorder %s27, 2
      %p169 = por %p167, %p168
      %p171 = scmp.ne.s32.totalorder %s154, %s170
      %p172 = scmp.eq.s32.totalorder %s27, 0
      %p173 = por %p171, %p172
      %s174 = ssub.s32 %s29, %s43
      %p175 = scmp.eq.s32.totalorder %s174, 0
      %s177 = sadd.s32 %s176, 1
      %s178 = scalar_select %p175, %s176, %s177
      %p181 = pneg %p175
      %p182 = scmp.eq.s32.totalorder %s21, 2
      %p183 = por %p181, %p182
      %p184 = scmp.ne.s32.totalorder %s176, %s179
      %p185 = scmp.eq.s32.totalorder %s21, 0
      %p186 = por %p184, %p185
      %p187 = scmp.ne.s32.totalorder %s176, %s179
      %p188 = scmp.eq.s32.totalorder %s26, 2
      %p189 = por %p187, %p188
      %p190 = scmp.ne.s32.totalorder %s179, %s180
      %p191 = scmp.eq.s32.totalorder %s26, 0
      %p192 = por %p190, %p191
      %p193 = scmp.ne.s32.totalorder %s179, %s180
      %p194 = scmp.eq.s32.totalorder %s27, 2
      %p195 = por %p193, %p194
      %p197 = scmp.ne.s32.totalorder %s180, %s196
      %p198 = scmp.eq.s32.totalorder %s27, 0
      %p199 = por %p197, %p198
      %s200 = ssub.s32 %s28, %s47
      %s201 = ssub.s32 %s30, %s39
      %s202 = sor.u32 %s200, %s201
      %s203 = ssub.s32 %s29, %s43
      %s204 = sor.u32 %s202, %s203
      %p205 = scmp.eq.s32.totalorder %s204, 0
      %s207 = sadd.s32 %s206, 1
      %s208 = scalar_select %p205, %s206, %s207
      %p211 = pneg %p205
      %p212 = scmp.eq.s32.totalorder %s21, 2
      %p213 = por %p211, %p212
      %p214 = scmp.ne.s32.totalorder %s206, %s209
      %p215 = scmp.eq.s32.totalorder %s21, 0
      %p216 = por %p214, %p215
      %p217 = scmp.ne.s32.totalorder %s206, %s209
      %p218 = scmp.eq.s32.totalorder %s26, 2
      %p219 = por %p217, %p218
      %p220 = scmp.ne.s32.totalorder %s209, %s210
      %p221 = scmp.eq.s32.totalorder %s26, 0
      %p222 = por %p220, %p221
      %p223 = scmp.ne.s32.totalorder %s209, %s210
      %p224 = scmp.eq.s32.totalorder %s27, 2
      %p225 = por %p223, %p224
      %p227 = scmp.ne.s32.totalorder %s210, %s226
      %p228 = scmp.eq.s32.totalorder %s27, 0
      %p229 = por %p227, %p228
      %p230 = scmp.le.s32.totalorder 1, %s21
      %p231 = scmp.lt.s32.totalorder %s21, 4
      %p232 = pnand %p230, %p231
      %p233 = pneg %p232
      // Predicated region
      $region9: #{tpu_custom_call.1} parent=5 // pred_check
        _
      $region10: #{tpu_custom_call.1} parent=5 // pred_check_branch
        %235 = sbr.rel (%p232) target = $region12
      $region11: #{tpu_custom_call.1} parent=5 // pred_region
        %s236 = ssub.s32 %s21, 1
        // Predicated region
        $region13: #{tpu_custom_call.1} parent=11 // pred_check
          %p237 = pneg %p166
        $region14: #{tpu_custom_call.1} parent=11 // pred_check_branch
          %239 = sbr.rel (%p237) target = $region16
        $region15: #{tpu_custom_call.1} parent=11 // pred_region
          %241 = vsyncadd [#allocation11], 0
          %s242 = smul.addr %s32, 4
          %s243 = scalar_lea.hbm %s3, %s242
          %s244 = sshll.u32 %s243, 4
          %s245 = int_to_ptr.hbm [resolvable:$true] %s244
          %s246 = sshll.u32 [#allocation10], 4
          %s247 = int_to_ptr.vmem [resolvable:$true] %s246
          %252 = dma.hbm_to_vmem [thread:$0]  %s245, 4608, %s247, [#allocation11], 64, 64, 4
        $region16: #{tpu_custom_call.1} parent=11 // pred_fallthru
          _
        // Predicated region
        $region17: #{tpu_custom_call.1} parent=11 // pred_check
          %p253 = pneg %p192
        $region18: #{tpu_custom_call.1} parent=11 // pred_check_branch
          %255 = sbr.rel (%p253) target = $region20
        $region19: #{tpu_custom_call.1} parent=11 // pred_region
          %p256 = scmp.lt.s32.totalorder %s32, 0
          %s257 = scalar_select %p256, %s32, 0
          %s258 = scalar_lea.vmem %s4, %s257
        $region20: #{tpu_custom_call.1} parent=11 // pred_fallthru
          _
      $region12: #{tpu_custom_call.1} parent=5 // pred_fallthru
        _
      %p259 = scmp.lt.s32.totalorder %s21, 3
      // Predicated region
      $region21: #{tpu_custom_call.1} parent=5 // pred_check
        %p260 = pneg %p259
      $region22: #{tpu_custom_call.1} parent=5 // pred_check_branch
        %262 = sbr.rel (%p260) target = $region24
      $region23: #{tpu_custom_call.1} parent=5 // pred_region
        // Predicated region
        $region25: #{tpu_custom_call.1} parent=23 // pred_check
          %p263 = pneg %p70
        $region26: #{tpu_custom_call.1} parent=23 // pred_check_branch
          %265 = sbr.rel (%p263) target = $region28
        $region27: #{tpu_custom_call.1} parent=23 // pred_region
          %s266 = sand.u32 %s60, 1
          %s267 = scalar_lea.sflag [#allocation5], %s266
          %s268 = sand.u32 %s60, 1
          %s269 = smul.addr %s268, 16
          %s270 = scalar_lea.vmem [#allocation4], %s269
          %s271 = smul.u32 %s30, 4
          %s272 = ssub.s32 %s271, 1
          %p273 = scmp.gt.s32.totalorder %s272, 0
          %s274 = scalar_select %p273, %s272, 0
          %s275 = smul.u32 2, %s274
          %277 = vsyncadd %s267, 0
          %s278 = smul.addr %s275, 2
          %s279 = smul.addr %s28, 48
          %s280 = sadd.s32 %s278, %s279
          %s281 = smul.addr %s280, 4
          %s282 = scalar_lea.hbm %s0, %s281
          %s283 = sshll.u32 %s282, 4
          %s284 = int_to_ptr.hbm [resolvable:$true] %s283
          %s285 = sshll.u32 %s270, 4
          %s286 = int_to_ptr.vmem [resolvable:$true] %s285
          %291 = dma.hbm_to_vmem [thread:$0]  %s284, 256, %s286, %s267, 64, 64, 4
        $region28: #{tpu_custom_call.1} parent=23 // pred_fallthru
          _
        // Predicated region
        $region29: #{tpu_custom_call.1} parent=23 // pred_check
          %p292 = pneg %p98
        $region30: #{tpu_custom_call.1} parent=23 // pred_check_branch
          %294 = sbr.rel (%p292) target = $region32
        $region31: #{tpu_custom_call.1} parent=23 // pred_region
          %s295 = sand.u32 %s21, 1
          %s296 = scalar_lea.sflag [#allocation8], %s295
          %s297 = sand.u32 %s88, 1
          %s298 = smul.addr %s297, 64
          %s299 = scalar_lea.vmem [#allocation7], %s298
          %s300 = smul.u32 8, %s30
          %302 = vsyncadd %s296, 0
          %s303 = smul.addr %s300, 2
          %s304 = smul.addr %s28, 48
          %s305 = sadd.s32 %s303, %s304
          %s306 = smul.addr %s305, 4
          %s307 = scalar_lea.hbm %s1, %s306
          %s308 = sshll.u32 %s307, 4
          %s309 = int_to_ptr.hbm [resolvable:$true] %s308
          %s310 = sshll.u32 %s299, 4
          %s311 = int_to_ptr.vmem [resolvable:$true] %s310
          %316 = dma.hbm_to_vmem [thread:$0]  %s309, 1024, %s311, %s296, 64, 64, 4
        $region32: #{tpu_custom_call.1} parent=23 // pred_fallthru
          _
        // Predicated region
        $region33: #{tpu_custom_call.1} parent=23 // pred_check
          %p317 = pneg %p134
        $region34: #{tpu_custom_call.1} parent=23 // pred_check_branch
          %319 = sbr.rel (%p317) target = $region36
        $region35: #{tpu_custom_call.1} parent=23 // pred_region
          %s320 = sand.u32 %s21, 1
          %s321 = scalar_lea.sflag [#allocation8], %s320
          %s322 = sand.u32 %s124, 1
          %s323 = smul.addr %s322, 16
          %s324 = scalar_lea.vmem [#allocation9], %s323
          %s325 = sadd.s32 %s30, 1
          %s326 = smul.u32 %s325, 4
          %p327 = scmp.lt.s32.totalorder %s326, 11
          %s328 = scalar_select %p327, %s326, 11
          %s329 = smul.u32 2, %s328
          %331 = vsyncadd %s321, 0
          %s332 = smul.addr %s329, 2
          %s333 = smul.addr %s28, 48
          %s334 = sadd.s32 %s332, %s333
          %s335 = smul.addr %s334, 4
          %s336 = scalar_lea.hbm %s2, %s335
          %s337 = sshll.u32 %s336, 4
          %s338 = int_to_ptr.hbm [resolvable:$true] %s337
          %s339 = sshll.u32 %s324, 4
          %s340 = int_to_ptr.vmem [resolvable:$true] %s339
          %345 = dma.hbm_to_vmem [thread:$0]  %s338, 256, %s340, %s321, 64, 64, 4
        $region36: #{tpu_custom_call.1} parent=23 // pred_fallthru
          _
      $region24: #{tpu_custom_call.1} parent=5 // pred_fallthru
        _
      %p346 = scmp.le.s32.totalorder 1, %s21
      %p347 = scmp.lt.s32.totalorder %s21, 4
      %p348 = pnand %p346, %p347
      %p349 = pneg %p348
      // Predicated region
      $region37: #{tpu_custom_call.1} parent=5 // pred_check
        _
      $region38: #{tpu_custom_call.1} parent=5 // pred_check_branch
        %351 = sbr.rel (%p348) target = $region40
      $region39: #{tpu_custom_call.1} parent=5 // pred_region
        %s352 = ssub.s32 %s21, 1
        %s353 = sand.u32 %s63, 1
        %s354 = scalar_lea.sflag [#allocation5], %s353
        %s355 = sand.u32 %s63, 1
        %s356 = smul.addr %s355, 16
        %s357 = scalar_lea.vmem [#allocation4], %s356
        // Predicated region
        $region41: #{tpu_custom_call.1} parent=39 // pred_check
          %p358 = pneg %p76
        $region42: #{tpu_custom_call.1} parent=39 // pred_check_branch
          %360 = sbr.rel (%p358) target = $region44
        $region43: #{tpu_custom_call.1} parent=39 // pred_region
          %362 = dma.done %s354, 256
        $region44: #{tpu_custom_call.1} parent=39 // pred_fallthru
          _
        %s363 = sand.u32 %s26, 1
        %s364 = scalar_lea.sflag [#allocation8], %s363
        %s365 = sand.u32 %s91, 1
        %s366 = smul.addr %s365, 64
        %s367 = scalar_lea.vmem [#allocation7], %s366
        // Predicated region
        $region45: #{tpu_custom_call.1} parent=39 // pred_check
          %p368 = pneg %p104
        $region46: #{tpu_custom_call.1} parent=39 // pred_check_branch
          %370 = sbr.rel (%p368) target = $region48
        $region47: #{tpu_custom_call.1} parent=39 // pred_region
          %372 = dma.done %s364, 1024
        $region48: #{tpu_custom_call.1} parent=39 // pred_fallthru
          _
        %s373 = sand.u32 %s26, 1
        %s374 = scalar_lea.sflag [#allocation8], %s373
        %s375 = sand.u32 %s127, 1
        %s376 = smul.addr %s375, 16
        %s377 = scalar_lea.vmem [#allocation9], %s376
        // Predicated region
        $region49: #{tpu_custom_call.1} parent=39 // pred_check
          %p378 = pneg %p140
        $region50: #{tpu_custom_call.1} parent=39 // pred_check_branch
          %380 = sbr.rel (%p378) target = $region52
        $region51: #{tpu_custom_call.1} parent=39 // pred_region
          %382 = dma.done %s374, 256
        $region52: #{tpu_custom_call.1} parent=39 // pred_fallthru
          _
        // Predicated region
        $region53: #{tpu_custom_call.1} parent=39 // pred_check
          %p383 = pneg %p166
        $region54: #{tpu_custom_call.1} parent=39 // pred_check_branch
          %385 = sbr.rel (%p383) target = $region56
        $region55: #{tpu_custom_call.1} parent=39 // pred_region
          %387 = dma.done [#allocation11], 4608
        $region56: #{tpu_custom_call.1} parent=39 // pred_fallthru
          _
        %s388 = sand.u32 %s63, 1
        %s389 = scalar_lea.sflag [#allocation5], %s388
        %s390 = sand.u32 %s63, 1
        %s391 = smul.addr %s390, 16
        %s392 = scalar_lea.vmem [#allocation4], %s391
        %p393 = pneg %p76
        %p394 = pneg %p73
        %s395 = sand.u32 %s26, 1
        %s396 = scalar_lea.sflag [#allocation8], %s395
        %s397 = sand.u32 %s91, 1
        %s398 = smul.addr %s397, 64
        %s399 = scalar_lea.vmem [#allocation7], %s398
        %p400 = pneg %p104
        %p401 = pneg %p101
        %s402 = sand.u32 %s26, 1
        %s403 = scalar_lea.sflag [#allocation8], %s402
        %s404 = sand.u32 %s127, 1
        %s405 = smul.addr %s404, 16
        %s406 = scalar_lea.vmem [#allocation9], %s405
        %p407 = pneg %p140
        %p408 = pneg %p137
        %p409 = pneg %p166
        %p410 = pneg %p163
        %p411 = scmp.lt.s32.totalorder %s32, 0
        %s412 = scalar_select %p411, %s32, 0
        %s413 = scalar_lea.vmem %s4, %s412
        %p414 = pneg %p192
        %p415 = pneg %p189
        %p416 = pneg %p222
        %p417 = pneg %p219
        %s418 = sand.u32 %s209, 1
        %s419 = scalar_lea.sflag [#allocation6], %s418
        %s420 = sand.u32 %s209, 1
        %s421 = smul.addr %s420, 64
        %s422 = scalar_lea.vmem [#allocation12], %s421
        %s423 = smul.u32 %s33, 4
        %s424 = ssub.s32 %s423, 1
        %p425 = scmp.gt.s32.totalorder %s424, 0
        %s426 = scalar_select %p425, %s424, 0
        %s427 = smul.u32 2, %s426
        %s428 = smul.u32 8, %s33
        %s429 = sadd.s32 %s33, 1
        %s430 = smul.u32 %s429, 4
        %p431 = scmp.lt.s32.totalorder %s430, 11
        %s432 = scalar_select %p431, %s430, 11
        %s433 = smul.u32 2, %s432
        %p434 = scmp.lt.s32.totalorder %s32, 0
        %s435 = scalar_select %p434, %s32, 0
        %s436 = scalar_lea.vmem %s4, %s435
        %s437 = smul.u32 8, %s33
        %vm439 = vcmask 516096
        %440 = vst.msk [vmem:[#allocation2] sm:$0x1] %vm439, 0
        %441 = vst.msk [vmem:[#allocation2 + $0xc] sm:$0x1] %vm439, 0
        %442 = vst.msk [vmem:[#allocation2 + $0x18] sm:$0x1] %vm439, 0
        %443 = vst.msk [vmem:[#allocation2 + $0x24] sm:$0x1] %vm439, 0
        %444 = vst.msk [vmem:[#allocation2 + $0x30] sm:$0x1] %vm439, 0
        %445 = vst.msk [vmem:[#allocation2 + $0x3c] sm:$0x1] %vm439, 0
        %446 = vst.msk [vmem:[#allocation2 + $0x48] sm:$0x1] %vm439, 0
        %447 = vst.msk [vmem:[#allocation2 + $0x54] sm:$0x1] %vm439, 0
        %448 = vst.msk [vmem:[#allocation2 + $0x60] sm:$0x1] %vm439, 0
        %449 = vst.msk [vmem:[#allocation2 + $0x6c] sm:$0x1] %vm439, 0
        %450 = vst.msk [vmem:[#allocation2 + $0x78] sm:$0x1] %vm439, 0
        %451 = vst.msk [vmem:[#allocation2 + $0x84] sm:$0x1] %vm439, 0
        %vm452 = vcmask 517121
        %453 = vst.msk [vmem:[#allocation2 + $0x8] sm:$0x2] %vm452, 0
        %454 = vst.msk [vmem:[#allocation2 + $0x14] sm:$0x2] %vm452, 0
        %455 = vst.msk [vmem:[#allocation2 + $0x20] sm:$0x2] %vm452, 0
        %456 = vst.msk [vmem:[#allocation2 + $0x2c] sm:$0x2] %vm452, 0
        %457 = vst.msk [vmem:[#allocation2 + $0x38] sm:$0x2] %vm452, 0
        %458 = vst.msk [vmem:[#allocation2 + $0x44] sm:$0x2] %vm452, 0
        %459 = vst.msk [vmem:[#allocation2 + $0x50] sm:$0x2] %vm452, 0
        %460 = vst.msk [vmem:[#allocation2 + $0x5c] sm:$0x2] %vm452, 0
        %461 = vst.msk [vmem:[#allocation2 + $0x68] sm:$0x2] %vm452, 0
        %462 = vst.msk [vmem:[#allocation2 + $0x74] sm:$0x2] %vm452, 0
        %463 = vst.msk [vmem:[#allocation2 + $0x80] sm:$0x2] %vm452, 0
        %464 = vst.msk [vmem:[#allocation2 + $0x8c] sm:$0x2] %vm452, 0
        %v465 = vld [vmem:[%s357] sm:$0xf]
        %v466 = vld [vmem:[%s357 + $0x4] sm:$0xf]
        %v467 = vld [vmem:[%s357 + $0x8] sm:$0xf]
        %v468 = vld [vmem:[%s357 + $0xc] sm:$0xf]
        %p469 = scmp.gt.s32.totalorder %s33, 0
        %s470 = scalar_select %p469, 1, 0
        %s471 = scvt.s32.f32 %s470
        %p473 = scmp.ne.f32.partialorder %s471, %s471
        %s474 = sshrl.u32 %s471, 16
        %s475 = sand.u32 %s474, 1
        %s476 = sadd.s32 32767, %s475
        %s477 = sadd.s32 %s471, %s476
        %s478 = sand.u32 %s477, 4294901760
        %s479 = scalar_select %p473, 2143289344, %s478
        %s481 = sshrl.u32 %s479, 16
        %s482 = sshll.u32 %s481, 16
        %s483 = sor.u32 %s481, %s482
        %v484 = vstv %s483
        %v486 = vunpack.c.l.bf16 %v465
        %v487 = vunpack.c.l.bf16 %v466
        %v488 = vunpack.c.l.bf16 %v467
        %v489 = vunpack.c.l.bf16 %v468
        %v490 = vunpack.c.l.bf16 %v484
        %v491 = vmul.f32 %v486, %v490
        %v492 = vmul.f32 %v487, %v490
        %v493 = vmul.f32 %v488, %v490
        %v494 = vmul.f32 %v489, %v490
        %v495 = vpack.c.bf16 %v491, %v491
        %v496 = vpack.c.bf16 %v492, %v492
        %v497 = vpack.c.bf16 %v493, %v493
        %v498 = vpack.c.bf16 %v494, %v494
        %vm503 = vcmask 1040384
        %vm504 = vcmask 1044484
        %vm505 = vmor %vm503, %vm504
        %v506 = vrot.slane %v495, 7
        %v507 = vrot.slane %v506, 4
        %v508 = vrot.slane %v496, 7
        %v509 = vsel %vm505, %v507, %v508
        %v510 = vrot.slane %v508, 4
        %v511 = vrot.slane %v497, 7
        %v512 = vrot.slane %v511, 4
        %v513 = vrot.slane %v498, 7
        %v514 = vsel %vm505, %v512, %v513
        %v515 = vrot.slane %v513, 4
        %vm522 = vcmask 519169
        %523 = vst.msk [vmem:[#allocation2] sm:$0xe] %vm522, %v506
        %vm524 = vcmask 519168
        %525 = vst.msk [vmem:[#allocation2 + $0x4] sm:$0xf] %vm524, %v509
        %526 = vst.msk [vmem:[#allocation2 + $0x8] sm:$0x1] %vm439, %v510
        %527 = vst.msk [vmem:[#allocation2 + $0xc] sm:$0xe] %vm522, %v511
        %528 = vst.msk [vmem:[#allocation2 + $0x10] sm:$0xf] %vm524, %v514
        %529 = vst.msk [vmem:[#allocation2 + $0x14] sm:$0x1] %vm439, %v515
        %v530 = vld [vmem:[%s377] sm:$0xf]
        %v531 = vld [vmem:[%s377 + $0x4] sm:$0xf]
        %v532 = vld [vmem:[%s377 + $0x8] sm:$0xf]
        %v533 = vld [vmem:[%s377 + $0xc] sm:$0xf]
        %p534 = scmp.lt.s32.totalorder %s33, 2
        %s535 = scalar_select %p534, 1, 0
        %s536 = scvt.s32.f32 %s535
        %p538 = scmp.ne.f32.partialorder %s536, %s536
        %s539 = sshrl.u32 %s536, 16
        %s540 = sand.u32 %s539, 1
        %s541 = sadd.s32 32767, %s540
        %s542 = sadd.s32 %s536, %s541
        %s543 = sand.u32 %s542, 4294901760
        %s544 = scalar_select %p538, 2143289344, %s543
        %s546 = sshrl.u32 %s544, 16
        %s547 = sshll.u32 %s546, 16
        %s548 = sor.u32 %s546, %s547
        %v549 = vstv %s548
        %v551 = vunpack.c.l.bf16 %v530
        %v552 = vunpack.c.l.bf16 %v531
        %v553 = vunpack.c.l.bf16 %v532
        %v554 = vunpack.c.l.bf16 %v533
        %v555 = vunpack.c.l.bf16 %v549
        %v556 = vmul.f32 %v551, %v555
        %v557 = vmul.f32 %v552, %v555
        %v558 = vmul.f32 %v553, %v555
        %v559 = vmul.f32 %v554, %v555
        %v560 = vpack.c.bf16 %v556, %v556
        %v561 = vpack.c.bf16 %v557, %v557
        %v562 = vpack.c.bf16 %v558, %v558
        %v563 = vpack.c.bf16 %v559, %v559
        %v568 = vrot.slane %v560, 7
        %v569 = vrot.slane %v568, 4
        %v570 = vrot.slane %v561, 7
        %v571 = vsel %vm505, %v569, %v570
        %v572 = vrot.slane %v570, 4
        %v573 = vrot.slane %v562, 7
        %v574 = vrot.slane %v573, 4
        %v575 = vrot.slane %v563, 7
        %v576 = vsel %vm505, %v574, %v575
        %v577 = vrot.slane %v575, 4
        %s584 = scalar_lea.vmem [#allocation2], 120
        %585 = vst.msk [vmem:[%s584] sm:$0xe] %vm522, %v568
        %586 = vst.msk [vmem:[%s584 + $0x4] sm:$0xf] %vm524, %v571
        %587 = vst.msk [vmem:[%s584 + $0x8] sm:$0x1] %vm439, %v572
        %588 = vst.msk [vmem:[%s584 + $0xc] sm:$0xe] %vm522, %v573
        %589 = vst.msk [vmem:[%s584 + $0x10] sm:$0xf] %vm524, %v576
        %590 = vst.msk [vmem:[%s584 + $0x14] sm:$0x1] %vm439, %v577
        %v591 = vld [vmem:[%s367] sm:$0xf]
        %v592 = vld [vmem:[%s367 + $0x4] sm:$0xf]
        %v593 = vld [vmem:[%s367 + $0x8] sm:$0xf]
        %v594 = vld [vmem:[%s367 + $0xc] sm:$0xf]
        %v595 = vld [vmem:[%s367 + $0x10] sm:$0xf]
        %v596 = vld [vmem:[%s367 + $0x14] sm:$0xf]
        %v597 = vld [vmem:[%s367 + $0x18] sm:$0xf]
        %v598 = vld [vmem:[%s367 + $0x1c] sm:$0xf]
        %v599 = vld [vmem:[%s367 + $0x20] sm:$0xf]
        %v600 = vld [vmem:[%s367 + $0x24] sm:$0xf]
        %v601 = vld [vmem:[%s367 + $0x28] sm:$0xf]
        %v602 = vld [vmem:[%s367 + $0x2c] sm:$0xf]
        %v603 = vld [vmem:[%s367 + $0x30] sm:$0xf]
        %v604 = vld [vmem:[%s367 + $0x34] sm:$0xf]
        %v605 = vld [vmem:[%s367 + $0x38] sm:$0xf]
        %v606 = vld [vmem:[%s367 + $0x3c] sm:$0xf]
        %v623 = vrot.slane %v591, 7
        %v624 = vrot.slane %v623, 4
        %v625 = vrot.slane %v592, 7
        %v626 = vsel %vm505, %v624, %v625
        %v627 = vrot.slane %v625, 4
        %v628 = vrot.slane %v593, 7
        %v629 = vrot.slane %v628, 4
        %v630 = vrot.slane %v594, 7
        %v631 = vsel %vm505, %v629, %v630
        %v632 = vrot.slane %v630, 4
        %v633 = vrot.slane %v595, 7
        %v634 = vrot.slane %v633, 4
        %v635 = vrot.slane %v596, 7
        %v636 = vsel %vm505, %v634, %v635
        %v637 = vrot.slane %v635, 4
        %v638 = vrot.slane %v597, 7
        %v639 = vrot.slane %v638, 4
        %v640 = vrot.slane %v598, 7
        %v641 = vsel %vm505, %v639, %v640
        %v642 = vrot.slane %v640, 4
        %v643 = vrot.slane %v599, 7
        %v644 = vrot.slane %v643, 4
        %v645 = vrot.slane %v600, 7
        %v646 = vsel %vm505, %v644, %v645
        %v647 = vrot.slane %v645, 4
        %v648 = vrot.slane %v601, 7
        %v649 = vrot.slane %v648, 4
        %v650 = vrot.slane %v602, 7
        %v651 = vsel %vm505, %v649, %v650
        %v652 = vrot.slane %v650, 4
        %v653 = vrot.slane %v603, 7
        %v654 = vrot.slane %v653, 4
        %v655 = vrot.slane %v604, 7
        %v656 = vsel %vm505, %v654, %v655
        %v657 = vrot.slane %v655, 4
        %v658 = vrot.slane %v605, 7
        %v659 = vrot.slane %v658, 4
        %v660 = vrot.slane %v606, 7
        %v661 = vsel %vm505, %v659, %v660
        %v662 = vrot.slane %v660, 4
        %s687 = scalar_lea.vmem [#allocation2], 24
        %688 = vst.msk [vmem:[%s687] sm:$0xe] %vm522, %v623
        %689 = vst.msk [vmem:[%s687 + $0x4] sm:$0xf] %vm524, %v626
        %690 = vst.msk [vmem:[%s687 + $0x8] sm:$0x1] %vm439, %v627
        %691 = vst.msk [vmem:[%s687 + $0xc] sm:$0xe] %vm522, %v628
        %692 = vst.msk [vmem:[%s687 + $0x10] sm:$0xf] %vm524, %v631
        %693 = vst.msk [vmem:[%s687 + $0x14] sm:$0x1] %vm439, %v632
        %694 = vst.msk [vmem:[%s687 + $0x18] sm:$0xe] %vm522, %v633
        %695 = vst.msk [vmem:[%s687 + $0x1c] sm:$0xf] %vm524, %v636
        %696 = vst.msk [vmem:[%s687 + $0x20] sm:$0x1] %vm439, %v637
        %697 = vst.msk [vmem:[%s687 + $0x24] sm:$0xe] %vm522, %v638
        %698 = vst.msk [vmem:[%s687 + $0x28] sm:$0xf] %vm524, %v641
        %699 = vst.msk [vmem:[%s687 + $0x2c] sm:$0x1] %vm439, %v642
        %700 = vst.msk [vmem:[%s687 + $0x30] sm:$0xe] %vm522, %v643
        %701 = vst.msk [vmem:[%s687 + $0x34] sm:$0xf] %vm524, %v646
        %702 = vst.msk [vmem:[%s687 + $0x38] sm:$0x1] %vm439, %v647
        %703 = vst.msk [vmem:[%s687 + $0x3c] sm:$0xe] %vm522, %v648
        %704 = vst.msk [vmem:[%s687 + $0x40] sm:$0xf] %vm524, %v651
        %705 = vst.msk [vmem:[%s687 + $0x44] sm:$0x1] %vm439, %v652
        %706 = vst.msk [vmem:[%s687 + $0x48] sm:$0xe] %vm522, %v653
        %707 = vst.msk [vmem:[%s687 + $0x4c] sm:$0xf] %vm524, %v656
        %708 = vst.msk [vmem:[%s687 + $0x50] sm:$0x1] %vm439, %v657
        %709 = vst.msk [vmem:[%s687 + $0x54] sm:$0xe] %vm522, %v658
        %710 = vst.msk [vmem:[%s687 + $0x58] sm:$0xf] %vm524, %v661
        %711 = vst.msk [vmem:[%s687 + $0x5c] sm:$0x1] %vm439, %v662
        %v712 = vld [vmem:[#allocation2] sm:$0xf]
        %v713 = vld [vmem:[#allocation2 + $0x4] sm:$0xf]
        %v714 = vld [vmem:[#allocation2 + $0x8] sm:$0x3]
        %v715 = vld [vmem:[#allocation2 + $0xc] sm:$0xf]
        %v716 = vld [vmem:[#allocation2 + $0x10] sm:$0xf]
        %v717 = vld [vmem:[#allocation2 + $0x14] sm:$0x3]
        %v718 = vld [vmem:[#allocation2 + $0x18] sm:$0xf]
        %v719 = vld [vmem:[#allocation2 + $0x1c] sm:$0xf]
        %v720 = vld [vmem:[#allocation2 + $0x20] sm:$0x3]
        %v721 = vld [vmem:[#allocation2 + $0x24] sm:$0xf]
        %v722 = vld [vmem:[#allocation2 + $0x28] sm:$0xf]
        %v723 = vld [vmem:[#allocation2 + $0x2c] sm:$0x3]
        %v724 = vld [vmem:[#allocation2 + $0x30] sm:$0xf]
        %v725 = vld [vmem:[#allocation2 + $0x34] sm:$0xf]
        %v726 = vld [vmem:[#allocation2 + $0x38] sm:$0x3]
        %v727 = vld [vmem:[#allocation2 + $0x3c] sm:$0xf]
        %v728 = vld [vmem:[#allocation2 + $0x40] sm:$0xf]
        %v729 = vld [vmem:[#allocation2 + $0x44] sm:$0x3]
        %v730 = vld [vmem:[#allocation2 + $0x48] sm:$0xf]
        %v731 = vld [vmem:[#allocation2 + $0x4c] sm:$0xf]
        %v732 = vld [vmem:[#allocation2 + $0x50] sm:$0x3]
        %v733 = vld [vmem:[#allocation2 + $0x54] sm:$0xf]
        %v734 = vld [vmem:[#allocation2 + $0x58] sm:$0xf]
        %v735 = vld [vmem:[#allocation2 + $0x5c] sm:$0x3]
        %v752 = vunpack.c.l.b16 %v712
        %v753 = vunpack.c.l.b16 %v713
        %v754 = vunpack.c.l.b16 %v715
        %v755 = vunpack.c.l.b16 %v716
        %v756 = vunpack.c.l.b16 %v718
        %v757 = vunpack.c.l.b16 %v719
        %v758 = vunpack.c.l.b16 %v721
        %v759 = vunpack.c.l.b16 %v722
        %v760 = vunpack.c.l.b16 %v724
        %v761 = vunpack.c.l.b16 %v725
        %v762 = vunpack.c.l.b16 %v727
        %v763 = vunpack.c.l.b16 %v728
        %v764 = vunpack.c.l.b16 %v730
        %v765 = vunpack.c.l.b16 %v731
        %v766 = vunpack.c.l.b16 %v733
        %v767 = vunpack.c.l.b16 %v734
        %v768 = vpack.c.b16 %v753, %v752
        %v769 = vpack.c.b16 %v755, %v754
        %v770 = vpack.c.b16 %v757, %v756
        %v771 = vpack.c.b16 %v759, %v758
        %v772 = vpack.c.b16 %v761, %v760
        %v773 = vpack.c.b16 %v763, %v762
        %v774 = vpack.c.b16 %v765, %v764
        %v775 = vpack.c.b16 %v767, %v766
        %v784 = vunpack.c.l.b16 %v714
        %v785 = vunpack.c.l.b16 %v717
        %v786 = vunpack.c.l.b16 %v720
        %v787 = vunpack.c.l.b16 %v723
        %v788 = vunpack.c.l.b16 %v726
        %v789 = vunpack.c.l.b16 %v729
        %v790 = vunpack.c.l.b16 %v732
        %v791 = vunpack.c.l.b16 %v735
        %v792 = vpack.c.b16 %v784, %v784
        %v793 = vpack.c.b16 %v785, %v785
        %v794 = vpack.c.b16 %v786, %v786
        %v795 = vpack.c.b16 %v787, %v787
        %v796 = vpack.c.b16 %v788, %v788
        %v797 = vpack.c.b16 %v789, %v789
        %v798 = vpack.c.b16 %v790, %v790
        %v799 = vpack.c.b16 %v791, %v791
        %vm800 = vcmask 1046528
        %v801 = vrot.slane %v768, 1
        %v802 = vrot.slane %v792, 1
        %v803 = vsel %vm800, %v801, %v802
        %v804 = vrot.slane %v769, 1
        %v805 = vrot.slane %v793, 1
        %v806 = vsel %vm800, %v804, %v805
        %v807 = vrot.slane %v770, 1
        %v808 = vrot.slane %v794, 1
        %v809 = vsel %vm800, %v807, %v808
        %v810 = vrot.slane %v771, 1
        %v811 = vrot.slane %v795, 1
        %v812 = vsel %vm800, %v810, %v811
        %v813 = vrot.slane %v772, 1
        %v814 = vrot.slane %v796, 1
        %v815 = vsel %vm800, %v813, %v814
        %v816 = vrot.slane %v773, 1
        %v817 = vrot.slane %v797, 1
        %v818 = vsel %vm800, %v816, %v817
        %v819 = vrot.slane %v774, 1
        %v820 = vrot.slane %v798, 1
        %v821 = vsel %vm800, %v819, %v820
        %v822 = vrot.slane %v775, 1
        %v823 = vrot.slane %v799, 1
        %v824 = vsel %vm800, %v822, %v823
        %825 = vrot.lane.b32.xlu0 %v803, 64
        %v826 = vpop.permute.xlu0 %825
        %827 = vrot.lane.b32.xlu0 %v806, 64
        %v828 = vpop.permute.xlu0 %827
        %829 = vrot.lane.b32.xlu0 %v809, 64
        %v830 = vpop.permute.xlu0 %829
        %831 = vrot.lane.b32.xlu0 %v812, 64
        %v832 = vpop.permute.xlu0 %831
        %833 = vrot.lane.b32.xlu0 %v815, 64
        %v834 = vpop.permute.xlu0 %833
        %835 = vrot.lane.b32.xlu0 %v818, 64
        %v836 = vpop.permute.xlu0 %835
        %837 = vrot.lane.b32.xlu0 %v821, 64
        %v838 = vpop.permute.xlu0 %837
        %839 = vrot.lane.b32.xlu0 %v824, 64
        %v840 = vpop.permute.xlu0 %839
        %vm841 = vcmask 1045504
        %v842 = vrot.slane %v768, 2
        %v843 = vrot.slane %v792, 2
        %v844 = vsel %vm841, %v842, %v843
        %v845 = vrot.slane %v769, 2
        %v846 = vrot.slane %v793, 2
        %v847 = vsel %vm841, %v845, %v846
        %v848 = vrot.slane %v770, 2
        %v849 = vrot.slane %v794, 2
        %v850 = vsel %vm841, %v848, %v849
        %v851 = vrot.slane %v771, 2
        %v852 = vrot.slane %v795, 2
        %v853 = vsel %vm841, %v851, %v852
        %v854 = vrot.slane %v772, 2
        %v855 = vrot.slane %v796, 2
        %v856 = vsel %vm841, %v854, %v855
        %v857 = vrot.slane %v773, 2
        %v858 = vrot.slane %v797, 2
        %v859 = vsel %vm841, %v857, %v858
        %v860 = vrot.slane %v774, 2
        %v861 = vrot.slane %v798, 2
        %v862 = vsel %vm841, %v860, %v861
        %v863 = vrot.slane %v775, 2
        %v864 = vrot.slane %v799, 2
        %v865 = vsel %vm841, %v863, %v864
        %vm866 = vcmask 523264
        %v869 = vsel %vm866, %v768, %v826
        %v873 = vsel %vm866, %v769, %v828
        %v877 = vsel %vm866, %v770, %v830
        %v881 = vsel %vm866, %v771, %v832
        %v885 = vsel %vm866, %v772, %v834
        %v889 = vsel %vm866, %v773, %v836
        %v893 = vsel %vm866, %v774, %v838
        %v897 = vsel %vm866, %v775, %v840
        %v899 = vld [vmem:[#allocation10] sm:$0xf]
        %v900 = vld [vmem:[#allocation10 + $0x4] sm:$0xf]
        %v901 = vld [vmem:[#allocation10 + $0x8] sm:$0xf]
        %v902 = vld [vmem:[#allocation10 + $0xc] sm:$0xf]
        %v903 = vld [vmem:[#allocation10 + $0x10] sm:$0xf]
        %v904 = vld [vmem:[#allocation10 + $0x14] sm:$0xf]
        %v905 = vld [vmem:[#allocation10 + $0x18] sm:$0xf]
        %v906 = vld [vmem:[#allocation10 + $0x1c] sm:$0xf]
        %v907 = vld [vmem:[#allocation10 + $0x20] sm:$0xf]
        %v908 = vld [vmem:[#allocation10 + $0x24] sm:$0xf]
        %v909 = vld [vmem:[#allocation10 + $0x28] sm:$0xf]
        %v910 = vld [vmem:[#allocation10 + $0x2c] sm:$0xf]
        %v911 = vld [vmem:[#allocation10 + $0x30] sm:$0xf]
        %v912 = vld [vmem:[#allocation10 + $0x34] sm:$0xf]
        %v913 = vld [vmem:[#allocation10 + $0x38] sm:$0xf]
        %v914 = vld [vmem:[#allocation10 + $0x3c] sm:$0xf]
        %v915 = vld [vmem:[#allocation10 + $0x40] sm:$0xf]
        %v916 = vld [vmem:[#allocation10 + $0x44] sm:$0xf]
        %v917 = vld [vmem:[#allocation10 + $0x48] sm:$0xf]
        %v918 = vld [vmem:[#allocation10 + $0x4c] sm:$0xf]
        %v919 = vld [vmem:[#allocation10 + $0x50] sm:$0xf]
        %v920 = vld [vmem:[#allocation10 + $0x54] sm:$0xf]
        %v921 = vld [vmem:[#allocation10 + $0x58] sm:$0xf]
        %v922 = vld [vmem:[#allocation10 + $0x5c] sm:$0xf]
        %v947 = vunpack.c.l.b16 %v899
        %v948 = vunpack.c.l.b16 %v900
        %v949 = vunpack.c.l.b16 %v901
        %v950 = vunpack.c.l.b16 %v902
        %v951 = vunpack.c.l.b16 %v903
        %v952 = vunpack.c.l.b16 %v904
        %v953 = vunpack.c.l.b16 %v905
        %v954 = vunpack.c.l.b16 %v906
        %v955 = vunpack.c.l.b16 %v907
        %v956 = vunpack.c.l.b16 %v908
        %v957 = vunpack.c.l.b16 %v909
        %v958 = vunpack.c.l.b16 %v910
        %v959 = vunpack.c.l.b16 %v911
        %v960 = vunpack.c.l.b16 %v912
        %v961 = vunpack.c.l.b16 %v913
        %v962 = vunpack.c.l.b16 %v914
        %v963 = vunpack.c.l.b16 %v915
        %v964 = vunpack.c.l.b16 %v916
        %v965 = vunpack.c.l.b16 %v917
        %v966 = vunpack.c.l.b16 %v918
        %v967 = vunpack.c.l.b16 %v919
        %v968 = vunpack.c.l.b16 %v920
        %v969 = vunpack.c.l.b16 %v921
        %v970 = vunpack.c.l.b16 %v922
        %v971 = vpack.c.b16 %v948, %v947
        %v972 = vpack.c.b16 %v950, %v949
        %v973 = vpack.c.b16 %v952, %v951
        %v974 = vpack.c.b16 %v954, %v953
        %v975 = vpack.c.b16 %v956, %v955
        %v976 = vpack.c.b16 %v958, %v957
        %v977 = vpack.c.b16 %v960, %v959
        %v978 = vpack.c.b16 %v962, %v961
        %v979 = vpack.c.b16 %v964, %v963
        %v980 = vpack.c.b16 %v966, %v965
        %v981 = vpack.c.b16 %v968, %v967
        %v982 = vpack.c.b16 %v970, %v969
        %v996 = vsel %vm866, %v844, 0
        %v999 = vsel %vm866, %v847, 0
        %v1002 = vsel %vm866, %v850, 0
        %v1005 = vsel %vm866, %v853, 0
        %v1008 = vsel %vm866, %v856, 0
        %v1011 = vsel %vm866, %v859, 0
        %v1014 = vsel %vm866, %v862, 0
        %v1017 = vsel %vm866, %v865, 0
        %1019 = vmatpush.bf16.msra.mxu0 %v978
        %1020 = vmatpush.bf16.msra.mxu0 %v977
        %1021 = vmatpush.bf16.msra.mxu0 %v976
        %1022 = vmatpush.bf16.msra.mxu0 %v975
        %1023 = vmatpush.bf16.msra.mxu0 %v974
        %1024 = vmatpush.bf16.msra.mxu0 %v973
        %1025 = vmatpush.bf16.msra.mxu0 %v972
        %1026 = vmatpush.bf16.msra.mxu0 %v971
        %1027 = vmatmul.bf16.gmra.mxu0 %v869
        %v1028 = vpop.f32.mrf.mxu0
        %v1029 = vadd.f32 0.0, %v1028
        %v1030 = vpop.f32.mrf.mxu0
        %v1031 = vadd.f32 0.0, %v1030
        %1032 = vmatmul.bf16.gmra.mxu0 %v873
        %v1033 = vpop.f32.mrf.mxu0
        %v1034 = vadd.f32 0.0, %v1033
        %v1035 = vpop.f32.mrf.mxu0
        %v1036 = vadd.f32 0.0, %v1035
        %1037 = vmatmul.bf16.gmra.mxu0 %v877
        %v1038 = vpop.f32.mrf.mxu0
        %v1039 = vadd.f32 0.0, %v1038
        %v1040 = vpop.f32.mrf.mxu0
        %v1041 = vadd.f32 0.0, %v1040
        %1042 = vmatmul.bf16.gmra.mxu0 %v881
        %v1043 = vpop.f32.mrf.mxu0
        %v1044 = vadd.f32 0.0, %v1043
        %v1045 = vpop.f32.mrf.mxu0
        %v1046 = vadd.f32 0.0, %v1045
        %1047 = vmatmul.bf16.gmra.mxu0 %v885
        %v1048 = vpop.f32.mrf.mxu0
        %v1049 = vadd.f32 0.0, %v1048
        %v1050 = vpop.f32.mrf.mxu0
        %v1051 = vadd.f32 0.0, %v1050
        %1052 = vmatmul.bf16.gmra.mxu0 %v889
        %v1053 = vpop.f32.mrf.mxu0
        %v1054 = vadd.f32 0.0, %v1053
        %v1055 = vpop.f32.mrf.mxu0
        %v1056 = vadd.f32 0.0, %v1055
        %1057 = vmatmul.bf16.gmra.mxu0 %v893
        %v1058 = vpop.f32.mrf.mxu0
        %v1059 = vadd.f32 0.0, %v1058
        %v1060 = vpop.f32.mrf.mxu0
        %v1061 = vadd.f32 0.0, %v1060
        %1062 = vmatmul.bf16.gmra.mxu0 %v897
        %v1063 = vpop.f32.mrf.mxu0
        %v1064 = vadd.f32 0.0, %v1063
        %v1065 = vpop.f32.mrf.mxu0
        %v1066 = vadd.f32 0.0, %v1065
        %1067 = vdwg.mxu0
        %1068 = vmatpush.bf16.msra.mxu0 0
        %1069 = vmatpush.bf16.msra.mxu0 0
        %1070 = vmatpush.bf16.msra.mxu0 0
        %1071 = vmatpush.bf16.msra.mxu0 0
        %1072 = vmatpush.bf16.msra.mxu0 %v982
        %1073 = vmatpush.bf16.msra.mxu0 %v981
        %1074 = vmatpush.bf16.msra.mxu0 %v980
        %1075 = vmatpush.bf16.msra.mxu0 %v979
        %1076 = vmatmul.bf16.gmra.mxu0 %v996
        %v1077 = vpop.f32.mrf.mxu0
        %v1078 = vadd.f32 %v1029, %v1077
        %v1079 = vpop.f32.mrf.mxu0
        %v1080 = vadd.f32 %v1031, %v1079
        %1081 = vmatmul.bf16.gmra.mxu0 %v999
        %v1082 = vpop.f32.mrf.mxu0
        %v1083 = vadd.f32 %v1034, %v1082
        %v1084 = vpop.f32.mrf.mxu0
        %v1085 = vadd.f32 %v1036, %v1084
        %1086 = vmatmul.bf16.gmra.mxu0 %v1002
        %v1087 = vpop.f32.mrf.mxu0
        %v1088 = vadd.f32 %v1039, %v1087
        %v1089 = vpop.f32.mrf.mxu0
        %v1090 = vadd.f32 %v1041, %v1089
        %1091 = vmatmul.bf16.gmra.mxu0 %v1005
        %v1092 = vpop.f32.mrf.mxu0
        %v1093 = vadd.f32 %v1044, %v1092
        %v1094 = vpop.f32.mrf.mxu0
        %v1095 = vadd.f32 %v1046, %v1094
        %1096 = vmatmul.bf16.gmra.mxu0 %v1008
        %v1097 = vpop.f32.mrf.mxu0
        %v1098 = vadd.f32 %v1049, %v1097
        %v1099 = vpop.f32.mrf.mxu0
        %v1100 = vadd.f32 %v1051, %v1099
        %1101 = vmatmul.bf16.gmra.mxu0 %v1011
        %v1102 = vpop.f32.mrf.mxu0
        %v1103 = vadd.f32 %v1054, %v1102
        %v1104 = vpop.f32.mrf.mxu0
        %v1105 = vadd.f32 %v1056, %v1104
        %1106 = vmatmul.bf16.gmra.mxu0 %v1014
        %v1107 = vpop.f32.mrf.mxu0
        %v1108 = vadd.f32 %v1059, %v1107
        %v1109 = vpop.f32.mrf.mxu0
        %v1110 = vadd.f32 %v1061, %v1109
        %1111 = vmatmul.bf16.gmra.mxu0 %v1017
        %v1112 = vpop.f32.mrf.mxu0
        %v1113 = vadd.f32 %v1064, %v1112
        %v1114 = vpop.f32.mrf.mxu0
        %v1115 = vadd.f32 %v1066, %v1114
        %1116 = vdwg.mxu0
        %1117 = vst [vmem:[#allocation3] sm:$0xff] %v1078
        %1118 = vst [vmem:[#allocation3 + $0x8] sm:$0xff] %v1080
        %1119 = vst [vmem:[#allocation3 + $0x10] sm:$0xff] %v1083
        %1120 = vst [vmem:[#allocation3 + $0x18] sm:$0xff] %v1085
        %1121 = vst [vmem:[#allocation3 + $0x20] sm:$0xff] %v1088
        %1122 = vst [vmem:[#allocation3 + $0x28] sm:$0xff] %v1090
        %1123 = vst [vmem:[#allocation3 + $0x30] sm:$0xff] %v1093
        %1124 = vst [vmem:[#allocation3 + $0x38] sm:$0xff] %v1095
        %1125 = vst [vmem:[#allocation3 + $0x40] sm:$0xff] %v1098
        %1126 = vst [vmem:[#allocation3 + $0x48] sm:$0xff] %v1100
        %1127 = vst [vmem:[#allocation3 + $0x50] sm:$0xff] %v1103
        %1128 = vst [vmem:[#allocation3 + $0x58] sm:$0xff] %v1105
        %1129 = vst [vmem:[#allocation3 + $0x60] sm:$0xff] %v1108
        %1130 = vst [vmem:[#allocation3 + $0x68] sm:$0xff] %v1110
        %1131 = vst [vmem:[#allocation3 + $0x70] sm:$0xff] %v1113
        %1132 = vst [vmem:[#allocation3 + $0x78] sm:$0xff] %v1115
        %v1133 = vld [vmem:[%s687] sm:$0xf]
        %v1134 = vld [vmem:[%s687 + $0x4] sm:$0xf]
        %v1135 = vld [vmem:[%s687 + $0x8] sm:$0x3]
        %v1136 = vld [vmem:[%s687 + $0xc] sm:$0xf]
        %v1137 = vld [vmem:[%s687 + $0x10] sm:$0xf]
        %v1138 = vld [vmem:[%s687 + $0x14] sm:$0x3]
        %v1139 = vld [vmem:[%s687 + $0x18] sm:$0xf]
        %v1140 = vld [vmem:[%s687 + $0x1c] sm:$0xf]
        %v1141 = vld [vmem:[%s687 + $0x20] sm:$0x3]
        %v1142 = vld [vmem:[%s687 + $0x24] sm:$0xf]
        %v1143 = vld [vmem:[%s687 + $0x28] sm:$0xf]
        %v1144 = vld [vmem:[%s687 + $0x2c] sm:$0x3]
        %v1145 = vld [vmem:[%s687 + $0x30] sm:$0xf]
        %v1146 = vld [vmem:[%s687 + $0x34] sm:$0xf]
        %v1147 = vld [vmem:[%s687 + $0x38] sm:$0x3]
        %v1148 = vld [vmem:[%s687 + $0x3c] sm:$0xf]
        %v1149 = vld [vmem:[%s687 + $0x40] sm:$0xf]
        %v1150 = vld [vmem:[%s687 + $0x44] sm:$0x3]
        %v1151 = vld [vmem:[%s687 + $0x48] sm:$0xf]
        %v1152 = vld [vmem:[%s687 + $0x4c] sm:$0xf]
        %v1153 = vld [vmem:[%s687 + $0x50] sm:$0x3]
        %v1154 = vld [vmem:[%s687 + $0x54] sm:$0xf]
        %v1155 = vld [vmem:[%s687 + $0x58] sm:$0xf]
        %v1156 = vld [vmem:[%s687 + $0x5c] sm:$0x3]
        %v1173 = vunpack.c.l.b16 %v1133
        %v1174 = vunpack.c.l.b16 %v1134
        %v1175 = vunpack.c.l.b16 %v1136
        %v1176 = vunpack.c.l.b16 %v1137
        %v1177 = vunpack.c.l.b16 %v1139
        %v1178 = vunpack.c.l.b16 %v1140
        %v1179 = vunpack.c.l.b16 %v1142
        %v1180 = vunpack.c.l.b16 %v1143
        %v1181 = vunpack.c.l.b16 %v1145
        %v1182 = vunpack.c.l.b16 %v1146
        %v1183 = vunpack.c.l.b16 %v1148
        %v1184 = vunpack.c.l.b16 %v1149
        %v1185 = vunpack.c.l.b16 %v1151
        %v1186 = vunpack.c.l.b16 %v1152
        %v1187 = vunpack.c.l.b16 %v1154
        %v1188 = vunpack.c.l.b16 %v1155
        %v1189 = vpack.c.b16 %v1174, %v1173
        %v1190 = vpack.c.b16 %v1176, %v1175
        %v1191 = vpack.c.b16 %v1178, %v1177
        %v1192 = vpack.c.b16 %v1180, %v1179
        %v1193 = vpack.c.b16 %v1182, %v1181
        %v1194 = vpack.c.b16 %v1184, %v1183
        %v1195 = vpack.c.b16 %v1186, %v1185
        %v1196 = vpack.c.b16 %v1188, %v1187
        %v1205 = vunpack.c.l.b16 %v1135
        %v1206 = vunpack.c.l.b16 %v1138
        %v1207 = vunpack.c.l.b16 %v1141
        %v1208 = vunpack.c.l.b16 %v1144
        %v1209 = vunpack.c.l.b16 %v1147
        %v1210 = vunpack.c.l.b16 %v1150
        %v1211 = vunpack.c.l.b16 %v1153
        %v1212 = vunpack.c.l.b16 %v1156
        %v1213 = vpack.c.b16 %v1205, %v1205
        %v1214 = vpack.c.b16 %v1206, %v1206
        %v1215 = vpack.c.b16 %v1207, %v1207
        %v1216 = vpack.c.b16 %v1208, %v1208
        %v1217 = vpack.c.b16 %v1209, %v1209
        %v1218 = vpack.c.b16 %v1210, %v1210
        %v1219 = vpack.c.b16 %v1211, %v1211
        %v1220 = vpack.c.b16 %v1212, %v1212
        %v1221 = vrot.slane %v1189, 1
        %v1222 = vrot.slane %v1213, 1
        %v1223 = vsel %vm800, %v1221, %v1222
        %v1224 = vrot.slane %v1190, 1
        %v1225 = vrot.slane %v1214, 1
        %v1226 = vsel %vm800, %v1224, %v1225
        %v1227 = vrot.slane %v1191, 1
        %v1228 = vrot.slane %v1215, 1
        %v1229 = vsel %vm800, %v1227, %v1228
        %v1230 = vrot.slane %v1192, 1
        %v1231 = vrot.slane %v1216, 1
        %v1232 = vsel %vm800, %v1230, %v1231
        %v1233 = vrot.slane %v1193, 1
        %v1234 = vrot.slane %v1217, 1
        %v1235 = vsel %vm800, %v1233, %v1234
        %v1236 = vrot.slane %v1194, 1
        %v1237 = vrot.slane %v1218, 1
        %v1238 = vsel %vm800, %v1236, %v1237
        %v1239 = vrot.slane %v1195, 1
        %v1240 = vrot.slane %v1219, 1
        %v1241 = vsel %vm800, %v1239, %v1240
        %v1242 = vrot.slane %v1196, 1
        %v1243 = vrot.slane %v1220, 1
        %v1244 = vsel %vm800, %v1242, %v1243
        %1245 = vrot.lane.b32.xlu0 %v1223, 64
        %v1246 = vpop.permute.xlu0 %1245
        %1247 = vrot.lane.b32.xlu0 %v1226, 64
        %v1248 = vpop.permute.xlu0 %1247
        %1249 = vrot.lane.b32.xlu0 %v1229, 64
        %v1250 = vpop.permute.xlu0 %1249
        %1251 = vrot.lane.b32.xlu0 %v1232, 64
        %v1252 = vpop.permute.xlu0 %1251
        %1253 = vrot.lane.b32.xlu0 %v1235, 64
        %v1254 = vpop.permute.xlu0 %1253
        %1255 = vrot.lane.b32.xlu0 %v1238, 64
        %v1256 = vpop.permute.xlu0 %1255
        %1257 = vrot.lane.b32.xlu0 %v1241, 64
        %v1258 = vpop.permute.xlu0 %1257
        %1259 = vrot.lane.b32.xlu0 %v1244, 64
        %v1260 = vpop.permute.xlu0 %1259
        %v1261 = vrot.slane %v1189, 2
        %v1262 = vrot.slane %v1213, 2
        %v1263 = vsel %vm841, %v1261, %v1262
        %v1264 = vrot.slane %v1190, 2
        %v1265 = vrot.slane %v1214, 2
        %v1266 = vsel %vm841, %v1264, %v1265
        %v1267 = vrot.slane %v1191, 2
        %v1268 = vrot.slane %v1215, 2
        %v1269 = vsel %vm841, %v1267, %v1268
        %v1270 = vrot.slane %v1192, 2
        %v1271 = vrot.slane %v1216, 2
        %v1272 = vsel %vm841, %v1270, %v1271
        %v1273 = vrot.slane %v1193, 2
        %v1274 = vrot.slane %v1217, 2
        %v1275 = vsel %vm841, %v1273, %v1274
        %v1276 = vrot.slane %v1194, 2
        %v1277 = vrot.slane %v1218, 2
        %v1278 = vsel %vm841, %v1276, %v1277
        %v1279 = vrot.slane %v1195, 2
        %v1280 = vrot.slane %v1219, 2
        %v1281 = vsel %vm841, %v1279, %v1280
        %v1282 = vrot.slane %v1196, 2
        %v1283 = vrot.slane %v1220, 2
        %v1284 = vsel %vm841, %v1282, %v1283
        %v1287 = vsel %vm866, %v1189, %v1246
        %v1291 = vsel %vm866, %v1190, %v1248
        %v1295 = vsel %vm866, %v1191, %v1250
        %v1299 = vsel %vm866, %v1192, %v1252
        %v1303 = vsel %vm866, %v1193, %v1254
        %v1307 = vsel %vm866, %v1194, %v1256
        %v1311 = vsel %vm866, %v1195, %v1258
        %v1315 = vsel %vm866, %v1196, %v1260
        %s1317 = scalar_lea.vmem [#allocation10], 96
        %v1318 = vld [vmem:[%s1317] sm:$0xf]
        %v1319 = vld [vmem:[%s1317 + $0x4] sm:$0xf]
        %v1320 = vld [vmem:[%s1317 + $0x8] sm:$0xf]
        %v1321 = vld [vmem:[%s1317 + $0xc] sm:$0xf]
        %v1322 = vld [vmem:[%s1317 + $0x10] sm:$0xf]
        %v1323 = vld [vmem:[%s1317 + $0x14] sm:$0xf]
        %v1324 = vld [vmem:[%s1317 + $0x18] sm:$0xf]
        %v1325 = vld [vmem:[%s1317 + $0x1c] sm:$0xf]
        %v1326 = vld [vmem:[%s1317 + $0x20] sm:$0xf]
        %v1327 = vld [vmem:[%s1317 + $0x24] sm:$0xf]
        %v1328 = vld [vmem:[%s1317 + $0x28] sm:$0xf]
        %v1329 = vld [vmem:[%s1317 + $0x2c] sm:$0xf]
        %v1330 = vld [vmem:[%s1317 + $0x30] sm:$0xf]
        %v1331 = vld [vmem:[%s1317 + $0x34] sm:$0xf]
        %v1332 = vld [vmem:[%s1317 + $0x38] sm:$0xf]
        %v1333 = vld [vmem:[%s1317 + $0x3c] sm:$0xf]
        %v1334 = vld [vmem:[%s1317 + $0x40] sm:$0xf]
        %v1335 = vld [vmem:[%s1317 + $0x44] sm:$0xf]
        %v1336 = vld [vmem:[%s1317 + $0x48] sm:$0xf]
        %v1337 = vld [vmem:[%s1317 + $0x4c] sm:$0xf]
        %v1338 = vld [vmem:[%s1317 + $0x50] sm:$0xf]
        %v1339 = vld [vmem:[%s1317 + $0x54] sm:$0xf]
        %v1340 = vld [vmem:[%s1317 + $0x58] sm:$0xf]
        %v1341 = vld [vmem:[%s1317 + $0x5c] sm:$0xf]
        %v1366 = vunpack.c.l.b16 %v1318
        %v1367 = vunpack.c.l.b16 %v1319
        %v1368 = vunpack.c.l.b16 %v1320
        %v1369 = vunpack.c.l.b16 %v1321
        %v1370 = vunpack.c.l.b16 %v1322
        %v1371 = vunpack.c.l.b16 %v1323
        %v1372 = vunpack.c.l.b16 %v1324
        %v1373 = vunpack.c.l.b16 %v1325
        %v1374 = vunpack.c.l.b16 %v1326
        %v1375 = vunpack.c.l.b16 %v1327
        %v1376 = vunpack.c.l.b16 %v1328
        %v1377 = vunpack.c.l.b16 %v1329
        %v1378 = vunpack.c.l.b16 %v1330
        %v1379 = vunpack.c.l.b16 %v1331
        %v1380 = vunpack.c.l.b16 %v1332
        %v1381 = vunpack.c.l.b16 %v1333
        %v1382 = vunpack.c.l.b16 %v1334
        %v1383 = vunpack.c.l.b16 %v1335
        %v1384 = vunpack.c.l.b16 %v1336
        %v1385 = vunpack.c.l.b16 %v1337
        %v1386 = vunpack.c.l.b16 %v1338
        %v1387 = vunpack.c.l.b16 %v1339
        %v1388 = vunpack.c.l.b16 %v1340
        %v1389 = vunpack.c.l.b16 %v1341
        %v1390 = vpack.c.b16 %v1367, %v1366
        %v1391 = vpack.c.b16 %v1369, %v1368
        %v1392 = vpack.c.b16 %v1371, %v1370
        %v1393 = vpack.c.b16 %v1373, %v1372
        %v1394 = vpack.c.b16 %v1375, %v1374
        %v1395 = vpack.c.b16 %v1377, %v1376
        %v1396 = vpack.c.b16 %v1379, %v1378
        %v1397 = vpack.c.b16 %v1381, %v1380
        %v1398 = vpack.c.b16 %v1383, %v1382
        %v1399 = vpack.c.b16 %v1385, %v1384
        %v1400 = vpack.c.b16 %v1387, %v1386
        %v1401 = vpack.c.b16 %v1389, %v1388
        %v1415 = vsel %vm866, %v1263, 0
        %v1418 = vsel %vm866, %v1266, 0
        %v1421 = vsel %vm866, %v1269, 0
        %v1424 = vsel %vm866, %v1272, 0
        %v1427 = vsel %vm866, %v1275, 0
        %v1430 = vsel %vm866, %v1278, 0
        %v1433 = vsel %vm866, %v1281, 0
        %v1436 = vsel %vm866, %v1284, 0
        %1438 = vmatpush.bf16.msra.mxu0 %v1397
        %1439 = vmatpush.bf16.msra.mxu0 %v1396
        %1440 = vmatpush.bf16.msra.mxu0 %v1395
        %1441 = vmatpush.bf16.msra.mxu0 %v1394
        %1442 = vmatpush.bf16.msra.mxu0 %v1393
        %1443 = vmatpush.bf16.msra.mxu0 %v1392
        %1444 = vmatpush.bf16.msra.mxu0 %v1391
        %1445 = vmatpush.bf16.msra.mxu0 %v1390
        %1446 = vmatmul.bf16.gmra.mxu0 %v1287
        %v1447 = vpop.f32.mrf.mxu0
        %v1448 = vadd.f32 0.0, %v1447
        %v1449 = vpop.f32.mrf.mxu0
        %v1450 = vadd.f32 0.0, %v1449
        %1451 = vmatmul.bf16.gmra.mxu0 %v1291
        %v1452 = vpop.f32.mrf.mxu0
        %v1453 = vadd.f32 0.0, %v1452
        %v1454 = vpop.f32.mrf.mxu0
        %v1455 = vadd.f32 0.0, %v1454
        %1456 = vmatmul.bf16.gmra.mxu0 %v1295
        %v1457 = vpop.f32.mrf.mxu0
        %v1458 = vadd.f32 0.0, %v1457
        %v1459 = vpop.f32.mrf.mxu0
        %v1460 = vadd.f32 0.0, %v1459
        %1461 = vmatmul.bf16.gmra.mxu0 %v1299
        %v1462 = vpop.f32.mrf.mxu0
        %v1463 = vadd.f32 0.0, %v1462
        %v1464 = vpop.f32.mrf.mxu0
        %v1465 = vadd.f32 0.0, %v1464
        %1466 = vmatmul.bf16.gmra.mxu0 %v1303
        %v1467 = vpop.f32.mrf.mxu0
        %v1468 = vadd.f32 0.0, %v1467
        %v1469 = vpop.f32.mrf.mxu0
        %v1470 = vadd.f32 0.0, %v1469
        %1471 = vmatmul.bf16.gmra.mxu0 %v1307
        %v1472 = vpop.f32.mrf.mxu0
        %v1473 = vadd.f32 0.0, %v1472
        %v1474 = vpop.f32.mrf.mxu0
        %v1475 = vadd.f32 0.0, %v1474
        %1476 = vmatmul.bf16.gmra.mxu0 %v1311
        %v1477 = vpop.f32.mrf.mxu0
        %v1478 = vadd.f32 0.0, %v1477
        %v1479 = vpop.f32.mrf.mxu0
        %v1480 = vadd.f32 0.0, %v1479
        %1481 = vmatmul.bf16.gmra.mxu0 %v1315
        %v1482 = vpop.f32.mrf.mxu0
        %v1483 = vadd.f32 0.0, %v1482
        %v1484 = vpop.f32.mrf.mxu0
        %v1485 = vadd.f32 0.0, %v1484
        %1486 = vdwg.mxu0
        %1487 = vmatpush.bf16.msra.mxu0 0
        %1488 = vmatpush.bf16.msra.mxu0 0
        %1489 = vmatpush.bf16.msra.mxu0 0
        %1490 = vmatpush.bf16.msra.mxu0 0
        %1491 = vmatpush.bf16.msra.mxu0 %v1401
        %1492 = vmatpush.bf16.msra.mxu0 %v1400
        %1493 = vmatpush.bf16.msra.mxu0 %v1399
        %1494 = vmatpush.bf16.msra.mxu0 %v1398
        %1495 = vmatmul.bf16.gmra.mxu0 %v1415
        %v1496 = vpop.f32.mrf.mxu0
        %v1497 = vadd.f32 %v1448, %v1496
        %v1498 = vpop.f32.mrf.mxu0
        %v1499 = vadd.f32 %v1450, %v1498
        %1500 = vmatmul.bf16.gmra.mxu0 %v1418
        %v1501 = vpop.f32.mrf.mxu0
        %v1502 = vadd.f32 %v1453, %v1501
        %v1503 = vpop.f32.mrf.mxu0
        %v1504 = vadd.f32 %v1455, %v1503
        %1505 = vmatmul.bf16.gmra.mxu0 %v1421
        %v1506 = vpop.f32.mrf.mxu0
        %v1507 = vadd.f32 %v1458, %v1506
        %v1508 = vpop.f32.mrf.mxu0
        %v1509 = vadd.f32 %v1460, %v1508
        %1510 = vmatmul.bf16.gmra.mxu0 %v1424
        %v1511 = vpop.f32.mrf.mxu0
        %v1512 = vadd.f32 %v1463, %v1511
        %v1513 = vpop.f32.mrf.mxu0
        %v1514 = vadd.f32 %v1465, %v1513
        %1515 = vmatmul.bf16.gmra.mxu0 %v1427
        %v1516 = vpop.f32.mrf.mxu0
        %v1517 = vadd.f32 %v1468, %v1516
        %v1518 = vpop.f32.mrf.mxu0
        %v1519 = vadd.f32 %v1470, %v1518
        %1520 = vmatmul.bf16.gmra.mxu0 %v1430
        %v1521 = vpop.f32.mrf.mxu0
        %v1522 = vadd.f32 %v1473, %v1521
        %v1523 = vpop.f32.mrf.mxu0
        %v1524 = vadd.f32 %v1475, %v1523
        %1525 = vmatmul.bf16.gmra.mxu0 %v1433
        %v1526 = vpop.f32.mrf.mxu0
        %v1527 = vadd.f32 %v1478, %v1526
        %v1528 = vpop.f32.mrf.mxu0
        %v1529 = vadd.f32 %v1480, %v1528
        %1530 = vmatmul.bf16.gmra.mxu0 %v1436
        %v1531 = vpop.f32.mrf.mxu0
        %v1532 = vadd.f32 %v1483, %v1531
        %v1533 = vpop.f32.mrf.mxu0
        %v1534 = vadd.f32 %v1485, %v1533
        %1535 = vdwg.mxu0
        %v1536 = vld [vmem:[#allocation3] sm:$0xff]
        %v1537 = vld [vmem:[#allocation3 + $0x8] sm:$0xff]
        %v1538 = vld [vmem:[#allocation3 + $0x10] sm:$0xff]
        %v1539 = vld [vmem:[#allocation3 + $0x18] sm:$0xff]
        %v1540 = vld [vmem:[#allocation3 + $0x20] sm:$0xff]
        %v1541 = vld [vmem:[#allocation3 + $0x28] sm:$0xff]
        %v1542 = vld [vmem:[#allocation3 + $0x30] sm:$0xff]
        %v1543 = vld [vmem:[#allocation3 + $0x38] sm:$0xff]
        %v1544 = vld [vmem:[#allocation3 + $0x40] sm:$0xff]
        %v1545 = vld [vmem:[#allocation3 + $0x48] sm:$0xff]
        %v1546 = vld [vmem:[#allocation3 + $0x50] sm:$0xff]
        %v1547 = vld [vmem:[#allocation3 + $0x58] sm:$0xff]
        %v1548 = vld [vmem:[#allocation3 + $0x60] sm:$0xff]
        %v1549 = vld [vmem:[#allocation3 + $0x68] sm:$0xff]
        %v1550 = vld [vmem:[#allocation3 + $0x70] sm:$0xff]
        %v1551 = vld [vmem:[#allocation3 + $0x78] sm:$0xff]
        %v1552 = vadd.f32 %v1536, %v1497
        %v1553 = vadd.f32 %v1537, %v1499
        %v1554 = vadd.f32 %v1538, %v1502
        %v1555 = vadd.f32 %v1539, %v1504
        %v1556 = vadd.f32 %v1540, %v1507
        %v1557 = vadd.f32 %v1541, %v1509
        %v1558 = vadd.f32 %v1542, %v1512
        %v1559 = vadd.f32 %v1543, %v1514
        %v1560 = vadd.f32 %v1544, %v1517
        %v1561 = vadd.f32 %v1545, %v1519
        %v1562 = vadd.f32 %v1546, %v1522
        %v1563 = vadd.f32 %v1547, %v1524
        %v1564 = vadd.f32 %v1548, %v1527
        %v1565 = vadd.f32 %v1549, %v1529
        %v1566 = vadd.f32 %v1550, %v1532
        %v1567 = vadd.f32 %v1551, %v1534
        %1568 = vst [vmem:[#allocation3] sm:$0xff] %v1552
        %1569 = vst [vmem:[#allocation3 + $0x8] sm:$0xff] %v1553
        %1570 = vst [vmem:[#allocation3 + $0x10] sm:$0xff] %v1554
        %1571 = vst [vmem:[#allocation3 + $0x18] sm:$0xff] %v1555
        %1572 = vst [vmem:[#allocation3 + $0x20] sm:$0xff] %v1556
        %1573 = vst [vmem:[#allocation3 + $0x28] sm:$0xff] %v1557
        %1574 = vst [vmem:[#allocation3 + $0x30] sm:$0xff] %v1558
        %1575 = vst [vmem:[#allocation3 + $0x38] sm:$0xff] %v1559
        %1576 = vst [vmem:[#allocation3 + $0x40] sm:$0xff] %v1560
        %1577 = vst [vmem:[#allocation3 + $0x48] sm:$0xff] %v1561
        %1578 = vst [vmem:[#allocation3 + $0x50] sm:$0xff] %v1562
        %1579 = vst [vmem:[#allocation3 + $0x58] sm:$0xff] %v1563
        %1580 = vst [vmem:[#allocation3 + $0x60] sm:$0xff] %v1564
        %1581 = vst [vmem:[#allocation3 + $0x68] sm:$0xff] %v1565
        %1582 = vst [vmem:[#allocation3 + $0x70] sm:$0xff] %v1566
        %1583 = vst [vmem:[#allocation3 + $0x78] sm:$0xff] %v1567
        %s1584 = scalar_lea.vmem [#allocation2], 48
        %v1585 = vld [vmem:[%s1584] sm:$0xf]
        %v1586 = vld [vmem:[%s1584 + $0x4] sm:$0xf]
        %v1587 = vld [vmem:[%s1584 + $0x8] sm:$0x3]
        %v1588 = vld [vmem:[%s1584 + $0xc] sm:$0xf]
        %v1589 = vld [vmem:[%s1584 + $0x10] sm:$0xf]
        %v1590 = vld [vmem:[%s1584 + $0x14] sm:$0x3]
        %v1591 = vld [vmem:[%s1584 + $0x18] sm:$0xf]
        %v1592 = vld [vmem:[%s1584 + $0x1c] sm:$0xf]
        %v1593 = vld [vmem:[%s1584 + $0x20] sm:$0x3]
        %v1594 = vld [vmem:[%s1584 + $0x24] sm:$0xf]
        %v1595 = vld [vmem:[%s1584 + $0x28] sm:$0xf]
        %v1596 = vld [vmem:[%s1584 + $0x2c] sm:$0x3]
        %v1597 = vld [vmem:[%s1584 + $0x30] sm:$0xf]
        %v1598 = vld [vmem:[%s1584 + $0x34] sm:$0xf]
        %v1599 = vld [vmem:[%s1584 + $0x38] sm:$0x3]
        %v1600 = vld [vmem:[%s1584 + $0x3c] sm:$0xf]
        %v1601 = vld [vmem:[%s1584 + $0x40] sm:$0xf]
        %v1602 = vld [vmem:[%s1584 + $0x44] sm:$0x3]
        %v1603 = vld [vmem:[%s1584 + $0x48] sm:$0xf]
        %v1604 = vld [vmem:[%s1584 + $0x4c] sm:$0xf]
        %v1605 = vld [vmem:[%s1584 + $0x50] sm:$0x3]
        %v1606 = vld [vmem:[%s1584 + $0x54] sm:$0xf]
        %v1607 = vld [vmem:[%s1584 + $0x58] sm:$0xf]
        %v1608 = vld [vmem:[%s1584 + $0x5c] sm:$0x3]
        %v1625 = vunpack.c.l.b16 %v1585
        %v1626 = vunpack.c.l.b16 %v1586
        %v1627 = vunpack.c.l.b16 %v1588
        %v1628 = vunpack.c.l.b16 %v1589
        %v1629 = vunpack.c.l.b16 %v1591
        %v1630 = vunpack.c.l.b16 %v1592
        %v1631 = vunpack.c.l.b16 %v1594
        %v1632 = vunpack.c.l.b16 %v1595
        %v1633 = vunpack.c.l.b16 %v1597
        %v1634 = vunpack.c.l.b16 %v1598
        %v1635 = vunpack.c.l.b16 %v1600
        %v1636 = vunpack.c.l.b16 %v1601
        %v1637 = vunpack.c.l.b16 %v1603
        %v1638 = vunpack.c.l.b16 %v1604
        %v1639 = vunpack.c.l.b16 %v1606
        %v1640 = vunpack.c.l.b16 %v1607
        %v1641 = vpack.c.b16 %v1626, %v1625
        %v1642 = vpack.c.b16 %v1628, %v1627
        %v1643 = vpack.c.b16 %v1630, %v1629
        %v1644 = vpack.c.b16 %v1632, %v1631
        %v1645 = vpack.c.b16 %v1634, %v1633
        %v1646 = vpack.c.b16 %v1636, %v1635
        %v1647 = vpack.c.b16 %v1638, %v1637
        %v1648 = vpack.c.b16 %v1640, %v1639
        %v1657 = vunpack.c.l.b16 %v1587
        %v1658 = vunpack.c.l.b16 %v1590
        %v1659 = vunpack.c.l.b16 %v1593
        %v1660 = vunpack.c.l.b16 %v1596
        %v1661 = vunpack.c.l.b16 %v1599
        %v1662 = vunpack.c.l.b16 %v1602
        %v1663 = vunpack.c.l.b16 %v1605
        %v1664 = vunpack.c.l.b16 %v1608
        %v1665 = vpack.c.b16 %v1657, %v1657
        %v1666 = vpack.c.b16 %v1658, %v1658
        %v1667 = vpack.c.b16 %v1659, %v1659
        %v1668 = vpack.c.b16 %v1660, %v1660
        %v1669 = vpack.c.b16 %v1661, %v1661
        %v1670 = vpack.c.b16 %v1662, %v1662
        %v1671 = vpack.c.b16 %v1663, %v1663
        %v1672 = vpack.c.b16 %v1664, %v1664
        %v1673 = vrot.slane %v1641, 1
        %v1674 = vrot.slane %v1665, 1
        %v1675 = vsel %vm800, %v1673, %v1674
        %v1676 = vrot.slane %v1642, 1
        %v1677 = vrot.slane %v1666, 1
        %v1678 = vsel %vm800, %v1676, %v1677
        %v1679 = vrot.slane %v1643, 1
        %v1680 = vrot.slane %v1667, 1
        %v1681 = vsel %vm800, %v1679, %v1680
        %v1682 = vrot.slane %v1644, 1
        %v1683 = vrot.slane %v1668, 1
        %v1684 = vsel %vm800, %v1682, %v1683
        %v1685 = vrot.slane %v1645, 1
        %v1686 = vrot.slane %v1669, 1
        %v1687 = vsel %vm800, %v1685, %v1686
        %v1688 = vrot.slane %v1646, 1
        %v1689 = vrot.slane %v1670, 1
        %v1690 = vsel %vm800, %v1688, %v1689
        %v1691 = vrot.slane %v1647, 1
        %v1692 = vrot.slane %v1671, 1
        %v1693 = vsel %vm800, %v1691, %v1692
        %v1694 = vrot.slane %v1648, 1
        %v1695 = vrot.slane %v1672, 1
        %v1696 = vsel %vm800, %v1694, %v1695
        %1697 = vrot.lane.b32.xlu0 %v1675, 64
        %v1698 = vpop.permute.xlu0 %1697
        %1699 = vrot.lane.b32.xlu0 %v1678, 64
        %v1700 = vpop.permute.xlu0 %1699
        %1701 = vrot.lane.b32.xlu0 %v1681, 64
        %v1702 = vpop.permute.xlu0 %1701
        %1703 = vrot.lane.b32.xlu0 %v1684, 64
        %v1704 = vpop.permute.xlu0 %1703
        %1705 = vrot.lane.b32.xlu0 %v1687, 64
        %v1706 = vpop.permute.xlu0 %1705
        %1707 = vrot.lane.b32.xlu0 %v1690, 64
        %v1708 = vpop.permute.xlu0 %1707
        %1709 = vrot.lane.b32.xlu0 %v1693, 64
        %v1710 = vpop.permute.xlu0 %1709
        %1711 = vrot.lane.b32.xlu0 %v1696, 64
        %v1712 = vpop.permute.xlu0 %1711
        %v1713 = vrot.slane %v1641, 2
        %v1714 = vrot.slane %v1665, 2
        %v1715 = vsel %vm841, %v1713, %v1714
        %v1716 = vrot.slane %v1642, 2
        %v1717 = vrot.slane %v1666, 2
        %v1718 = vsel %vm841, %v1716, %v1717
        %v1719 = vrot.slane %v1643, 2
        %v1720 = vrot.slane %v1667, 2
        %v1721 = vsel %vm841, %v1719, %v1720
        %v1722 = vrot.slane %v1644, 2
        %v1723 = vrot.slane %v1668, 2
        %v1724 = vsel %vm841, %v1722, %v1723
        %v1725 = vrot.slane %v1645, 2
        %v1726 = vrot.slane %v1669, 2
        %v1727 = vsel %vm841, %v1725, %v1726
        %v1728 = vrot.slane %v1646, 2
        %v1729 = vrot.slane %v1670, 2
        %v1730 = vsel %vm841, %v1728, %v1729
        %v1731 = vrot.slane %v1647, 2
        %v1732 = vrot.slane %v1671, 2
        %v1733 = vsel %vm841, %v1731, %v1732
        %v1734 = vrot.slane %v1648, 2
        %v1735 = vrot.slane %v1672, 2
        %v1736 = vsel %vm841, %v1734, %v1735
        %v1739 = vsel %vm866, %v1641, %v1698
        %v1743 = vsel %vm866, %v1642, %v1700
        %v1747 = vsel %vm866, %v1643, %v1702
        %v1751 = vsel %vm866, %v1644, %v1704
        %v1755 = vsel %vm866, %v1645, %v1706
        %v1759 = vsel %vm866, %v1646, %v1708
        %v1763 = vsel %vm866, %v1647, %v1710
        %v1767 = vsel %vm866, %v1648, %v1712
        %s1769 = scalar_lea.vmem [#allocation10], 192
        %v1770 = vld [vmem:[%s1769] sm:$0xf]
        %v1771 = vld [vmem:[%s1769 + $0x4] sm:$0xf]
        %v1772 = vld [vmem:[%s1769 + $0x8] sm:$0xf]
        %v1773 = vld [vmem:[%s1769 + $0xc] sm:$0xf]
        %v1774 = vld [vmem:[%s1769 + $0x10] sm:$0xf]
        %v1775 = vld [vmem:[%s1769 + $0x14] sm:$0xf]
        %v1776 = vld [vmem:[%s1769 + $0x18] sm:$0xf]
        %v1777 = vld [vmem:[%s1769 + $0x1c] sm:$0xf]
        %v1778 = vld [vmem:[%s1769 + $0x20] sm:$0xf]
        %v1779 = vld [vmem:[%s1769 + $0x24] sm:$0xf]
        %v1780 = vld [vmem:[%s1769 + $0x28] sm:$0xf]
        %v1781 = vld [vmem:[%s1769 + $0x2c] sm:$0xf]
        %v1782 = vld [vmem:[%s1769 + $0x30] sm:$0xf]
        %v1783 = vld [vmem:[%s1769 + $0x34] sm:$0xf]
        %v1784 = vld [vmem:[%s1769 + $0x38] sm:$0xf]
        %v1785 = vld [vmem:[%s1769 + $0x3c] sm:$0xf]
        %v1786 = vld [vmem:[%s1769 + $0x40] sm:$0xf]
        %v1787 = vld [vmem:[%s1769 + $0x44] sm:$0xf]
        %v1788 = vld [vmem:[%s1769 + $0x48] sm:$0xf]
        %v1789 = vld [vmem:[%s1769 + $0x4c] sm:$0xf]
        %v1790 = vld [vmem:[%s1769 + $0x50] sm:$0xf]
        %v1791 = vld [vmem:[%s1769 + $0x54] sm:$0xf]
        %v1792 = vld [vmem:[%s1769 + $0x58] sm:$0xf]
        %v1793 = vld [vmem:[%s1769 + $0x5c] sm:$0xf]
        %v1818 = vunpack.c.l.b16 %v1770
        %v1819 = vunpack.c.l.b16 %v1771
        %v1820 = vunpack.c.l.b16 %v1772
        %v1821 = vunpack.c.l.b16 %v1773
        %v1822 = vunpack.c.l.b16 %v1774
        %v1823 = vunpack.c.l.b16 %v1775
        %v1824 = vunpack.c.l.b16 %v1776
        %v1825 = vunpack.c.l.b16 %v1777
        %v1826 = vunpack.c.l.b16 %v1778
        %v1827 = vunpack.c.l.b16 %v1779
        %v1828 = vunpack.c.l.b16 %v1780
        %v1829 = vunpack.c.l.b16 %v1781
        %v1830 = vunpack.c.l.b16 %v1782
        %v1831 = vunpack.c.l.b16 %v1783
        %v1832 = vunpack.c.l.b16 %v1784
        %v1833 = vunpack.c.l.b16 %v1785
        %v1834 = vunpack.c.l.b16 %v1786
        %v1835 = vunpack.c.l.b16 %v1787
        %v1836 = vunpack.c.l.b16 %v1788
        %v1837 = vunpack.c.l.b16 %v1789
        %v1838 = vunpack.c.l.b16 %v1790
        %v1839 = vunpack.c.l.b16 %v1791
        %v1840 = vunpack.c.l.b16 %v1792
        %v1841 = vunpack.c.l.b16 %v1793
        %v1842 = vpack.c.b16 %v1819, %v1818
        %v1843 = vpack.c.b16 %v1821, %v1820
        %v1844 = vpack.c.b16 %v1823, %v1822
        %v1845 = vpack.c.b16 %v1825, %v1824
        %v1846 = vpack.c.b16 %v1827, %v1826
        %v1847 = vpack.c.b16 %v1829, %v1828
        %v1848 = vpack.c.b16 %v1831, %v1830
        %v1849 = vpack.c.b16 %v1833, %v1832
        %v1850 = vpack.c.b16 %v1835, %v1834
        %v1851 = vpack.c.b16 %v1837, %v1836
        %v1852 = vpack.c.b16 %v1839, %v1838
        %v1853 = vpack.c.b16 %v1841, %v1840
        %v1867 = vsel %vm866, %v1715, 0
        %v1870 = vsel %vm866, %v1718, 0
        %v1873 = vsel %vm866, %v1721, 0
        %v1876 = vsel %vm866, %v1724, 0
        %v1879 = vsel %vm866, %v1727, 0
        %v1882 = vsel %vm866, %v1730, 0
        %v1885 = vsel %vm866, %v1733, 0
        %v1888 = vsel %vm866, %v1736, 0
        %1890 = vmatpush.bf16.msra.mxu0 %v1849
        %1891 = vmatpush.bf16.msra.mxu0 %v1848
        %1892 = vmatpush.bf16.msra.mxu0 %v1847
        %1893 = vmatpush.bf16.msra.mxu0 %v1846
        %1894 = vmatpush.bf16.msra.mxu0 %v1845
        %1895 = vmatpush.bf16.msra.mxu0 %v1844
        %1896 = vmatpush.bf16.msra.mxu0 %v1843
        %1897 = vmatpush.bf16.msra.mxu0 %v1842
        %1898 = vmatmul.bf16.gmra.mxu0 %v1739
        %v1899 = vpop.f32.mrf.mxu0
        %v1900 = vadd.f32 0.0, %v1899
        %v1901 = vpop.f32.mrf.mxu0
        %v1902 = vadd.f32 0.0, %v1901
        %1903 = vmatmul.bf16.gmra.mxu0 %v1743
        %v1904 = vpop.f32.mrf.mxu0
        %v1905 = vadd.f32 0.0, %v1904
        %v1906 = vpop.f32.mrf.mxu0
        %v1907 = vadd.f32 0.0, %v1906
        %1908 = vmatmul.bf16.gmra.mxu0 %v1747
        %v1909 = vpop.f32.mrf.mxu0
        %v1910 = vadd.f32 0.0, %v1909
        %v1911 = vpop.f32.mrf.mxu0
        %v1912 = vadd.f32 0.0, %v1911
        %1913 = vmatmul.bf16.gmra.mxu0 %v1751
        %v1914 = vpop.f32.mrf.mxu0
        %v1915 = vadd.f32 0.0, %v1914
        %v1916 = vpop.f32.mrf.mxu0
        %v1917 = vadd.f32 0.0, %v1916
        %1918 = vmatmul.bf16.gmra.mxu0 %v1755
        %v1919 = vpop.f32.mrf.mxu0
        %v1920 = vadd.f32 0.0, %v1919
        %v1921 = vpop.f32.mrf.mxu0
        %v1922 = vadd.f32 0.0, %v1921
        %1923 = vmatmul.bf16.gmra.mxu0 %v1759
        %v1924 = vpop.f32.mrf.mxu0
        %v1925 = vadd.f32 0.0, %v1924
        %v1926 = vpop.f32.mrf.mxu0
        %v1927 = vadd.f32 0.0, %v1926
        %1928 = vmatmul.bf16.gmra.mxu0 %v1763
        %v1929 = vpop.f32.mrf.mxu0
        %v1930 = vadd.f32 0.0, %v1929
        %v1931 = vpop.f32.mrf.mxu0
        %v1932 = vadd.f32 0.0, %v1931
        %1933 = vmatmul.bf16.gmra.mxu0 %v1767
        %v1934 = vpop.f32.mrf.mxu0
        %v1935 = vadd.f32 0.0, %v1934
        %v1936 = vpop.f32.mrf.mxu0
        %v1937 = vadd.f32 0.0, %v1936
        %1938 = vdwg.mxu0
        %1939 = vmatpush.bf16.msra.mxu0 0
        %1940 = vmatpush.bf16.msra.mxu0 0
        %1941 = vmatpush.bf16.msra.mxu0 0
        %1942 = vmatpush.bf16.msra.mxu0 0
        %1943 = vmatpush.bf16.msra.mxu0 %v1853
        %1944 = vmatpush.bf16.msra.mxu0 %v1852
        %1945 = vmatpush.bf16.msra.mxu0 %v1851
        %1946 = vmatpush.bf16.msra.mxu0 %v1850
        %1947 = vmatmul.bf16.gmra.mxu0 %v1867
        %v1948 = vpop.f32.mrf.mxu0
        %v1949 = vadd.f32 %v1900, %v1948
        %v1950 = vpop.f32.mrf.mxu0
        %v1951 = vadd.f32 %v1902, %v1950
        %1952 = vmatmul.bf16.gmra.mxu0 %v1870
        %v1953 = vpop.f32.mrf.mxu0
        %v1954 = vadd.f32 %v1905, %v1953
        %v1955 = vpop.f32.mrf.mxu0
        %v1956 = vadd.f32 %v1907, %v1955
        %1957 = vmatmul.bf16.gmra.mxu0 %v1873
        %v1958 = vpop.f32.mrf.mxu0
        %v1959 = vadd.f32 %v1910, %v1958
        %v1960 = vpop.f32.mrf.mxu0
        %v1961 = vadd.f32 %v1912, %v1960
        %1962 = vmatmul.bf16.gmra.mxu0 %v1876
        %v1963 = vpop.f32.mrf.mxu0
        %v1964 = vadd.f32 %v1915, %v1963
        %v1965 = vpop.f32.mrf.mxu0
        %v1966 = vadd.f32 %v1917, %v1965
        %1967 = vmatmul.bf16.gmra.mxu0 %v1879
        %v1968 = vpop.f32.mrf.mxu0
        %v1969 = vadd.f32 %v1920, %v1968
        %v1970 = vpop.f32.mrf.mxu0
        %v1971 = vadd.f32 %v1922, %v1970
        %1972 = vmatmul.bf16.gmra.mxu0 %v1882
        %v1973 = vpop.f32.mrf.mxu0
        %v1974 = vadd.f32 %v1925, %v1973
        %v1975 = vpop.f32.mrf.mxu0
        %v1976 = vadd.f32 %v1927, %v1975
        %1977 = vmatmul.bf16.gmra.mxu0 %v1885
        %v1978 = vpop.f32.mrf.mxu0
        %v1979 = vadd.f32 %v1930, %v1978
        %v1980 = vpop.f32.mrf.mxu0
        %v1981 = vadd.f32 %v1932, %v1980
        %1982 = vmatmul.bf16.gmra.mxu0 %v1888
        %v1983 = vpop.f32.mrf.mxu0
        %v1984 = vadd.f32 %v1935, %v1983
        %v1985 = vpop.f32.mrf.mxu0
        %v1986 = vadd.f32 %v1937, %v1985
        %1987 = vdwg.mxu0
        %v1988 = vld [vmem:[#allocation3] sm:$0xff]
        %v1989 = vld [vmem:[#allocation3 + $0x8] sm:$0xff]
        %v1990 = vld [vmem:[#allocation3 + $0x10] sm:$0xff]
        %v1991 = vld [vmem:[#allocation3 + $0x18] sm:$0xff]
        %v1992 = vld [vmem:[#allocation3 + $0x20] sm:$0xff]
        %v1993 = vld [vmem:[#allocation3 + $0x28] sm:$0xff]
        %v1994 = vld [vmem:[#allocation3 + $0x30] sm:$0xff]
        %v1995 = vld [vmem:[#allocation3 + $0x38] sm:$0xff]
        %v1996 = vld [vmem:[#allocation3 + $0x40] sm:$0xff]
        %v1997 = vld [vmem:[#allocation3 + $0x48] sm:$0xff]
        %v1998 = vld [vmem:[#allocation3 + $0x50] sm:$0xff]
        %v1999 = vld [vmem:[#allocation3 + $0x58] sm:$0xff]
        %v2000 = vld [vmem:[#allocation3 + $0x60] sm:$0xff]
        %v2001 = vld [vmem:[#allocation3 + $0x68] sm:$0xff]
        %v2002 = vld [vmem:[#allocation3 + $0x70] sm:$0xff]
        %v2003 = vld [vmem:[#allocation3 + $0x78] sm:$0xff]
        %v2004 = vadd.f32 %v1988, %v1949
        %v2005 = vadd.f32 %v1989, %v1951
        %v2006 = vadd.f32 %v1990, %v1954
        %v2007 = vadd.f32 %v1991, %v1956
        %v2008 = vadd.f32 %v1992, %v1959
        %v2009 = vadd.f32 %v1993, %v1961
        %v2010 = vadd.f32 %v1994, %v1964
        %v2011 = vadd.f32 %v1995, %v1966
        %v2012 = vadd.f32 %v1996, %v1969
        %v2013 = vadd.f32 %v1997, %v1971
        %v2014 = vadd.f32 %v1998, %v1974
        %v2015 = vadd.f32 %v1999, %v1976
        %v2016 = vadd.f32 %v2000, %v1979
        %v2017 = vadd.f32 %v2001, %v1981
        %v2018 = vadd.f32 %v2002, %v1984
        %v2019 = vadd.f32 %v2003, %v1986
        %2020 = vst [vmem:[#allocation3] sm:$0xff] %v2004
        %2021 = vst [vmem:[#allocation3 + $0x8] sm:$0xff] %v2005
        %2022 = vst [vmem:[#allocation3 + $0x10] sm:$0xff] %v2006
        %2023 = vst [vmem:[#allocation3 + $0x18] sm:$0xff] %v2007
        %2024 = vst [vmem:[#allocation3 + $0x20] sm:$0xff] %v2008
        %2025 = vst [vmem:[#allocation3 + $0x28] sm:$0xff] %v2009
        %2026 = vst [vmem:[#allocation3 + $0x30] sm:$0xff] %v2010
        %2027 = vst [vmem:[#allocation3 + $0x38] sm:$0xff] %v2011
        %2028 = vst [vmem:[#allocation3 + $0x40] sm:$0xff] %v2012
        %2029 = vst [vmem:[#allocation3 + $0x48] sm:$0xff] %v2013
        %2030 = vst [vmem:[#allocation3 + $0x50] sm:$0xff] %v2014
        %2031 = vst [vmem:[#allocation3 + $0x58] sm:$0xff] %v2015
        %2032 = vst [vmem:[#allocation3 + $0x60] sm:$0xff] %v2016
        %2033 = vst [vmem:[#allocation3 + $0x68] sm:$0xff] %v2017
        %2034 = vst [vmem:[#allocation3 + $0x70] sm:$0xff] %v2018
        %2035 = vst [vmem:[#allocation3 + $0x78] sm:$0xff] %v2019
        %v2036 = vld [vmem:[#allocation3] sm:$0xff]
        %v2037 = vld [vmem:[#allocation3 + $0x8] sm:$0xff]
        %v2038 = vld [vmem:[#allocation3 + $0x10] sm:$0xff]
        %v2039 = vld [vmem:[#allocation3 + $0x18] sm:$0xff]
        %v2040 = vld [vmem:[#allocation3 + $0x20] sm:$0xff]
        %v2041 = vld [vmem:[#allocation3 + $0x28] sm:$0xff]
        %v2042 = vld [vmem:[#allocation3 + $0x30] sm:$0xff]
        %v2043 = vld [vmem:[#allocation3 + $0x38] sm:$0xff]
        %v2044 = vld [vmem:[#allocation3 + $0x40] sm:$0xff]
        %v2045 = vld [vmem:[#allocation3 + $0x48] sm:$0xff]
        %v2046 = vld [vmem:[#allocation3 + $0x50] sm:$0xff]
        %v2047 = vld [vmem:[#allocation3 + $0x58] sm:$0xff]
        %v2048 = vld [vmem:[#allocation3 + $0x60] sm:$0xff]
        %v2049 = vld [vmem:[#allocation3 + $0x68] sm:$0xff]
        %v2050 = vld [vmem:[#allocation3 + $0x70] sm:$0xff]
        %v2051 = vld [vmem:[#allocation3 + $0x78] sm:$0xff]
        %v2052 = vld [vmem:[%s436] sm:$0x1]
        %v2054 = vperm.slane %v2052, 0
        %v2056 = vadd.f32 %v2036, %v2054
        %v2057 = vadd.f32 %v2037, %v2054
        %v2058 = vadd.f32 %v2038, %v2054
        %v2059 = vadd.f32 %v2039, %v2054
        %v2060 = vadd.f32 %v2040, %v2054
        %v2061 = vadd.f32 %v2041, %v2054
        %v2062 = vadd.f32 %v2042, %v2054
        %v2063 = vadd.f32 %v2043, %v2054
        %v2064 = vadd.f32 %v2044, %v2054
        %v2065 = vadd.f32 %v2045, %v2054
        %v2066 = vadd.f32 %v2046, %v2054
        %v2067 = vadd.f32 %v2047, %v2054
        %v2068 = vadd.f32 %v2048, %v2054
        %v2069 = vadd.f32 %v2049, %v2054
        %v2070 = vadd.f32 %v2050, %v2054
        %v2071 = vadd.f32 %v2051, %v2054
        %v2072 = vmax.f32 %v2056, 0.0
        %v2073 = vmax.f32 %v2057, 0.0
        %v2074 = vmax.f32 %v2058, 0.0
        %v2075 = vmax.f32 %v2059, 0.0
        %v2076 = vmax.f32 %v2060, 0.0
        %v2077 = vmax.f32 %v2061, 0.0
        %v2078 = vmax.f32 %v2062, 0.0
        %v2079 = vmax.f32 %v2063, 0.0
        %v2080 = vmax.f32 %v2064, 0.0
        %v2081 = vmax.f32 %v2065, 0.0
        %v2082 = vmax.f32 %v2066, 0.0
        %v2083 = vmax.f32 %v2067, 0.0
        %v2084 = vmax.f32 %v2068, 0.0
        %v2085 = vmax.f32 %v2069, 0.0
        %v2086 = vmax.f32 %v2070, 0.0
        %v2087 = vmax.f32 %v2071, 0.0
        %v2088 = vpack.c.bf16 %v2072, %v2072
        %v2089 = vpack.c.bf16 %v2073, %v2073
        %v2090 = vpack.c.bf16 %v2074, %v2074
        %v2091 = vpack.c.bf16 %v2075, %v2075
        %v2092 = vpack.c.bf16 %v2076, %v2076
        %v2093 = vpack.c.bf16 %v2077, %v2077
        %v2094 = vpack.c.bf16 %v2078, %v2078
        %v2095 = vpack.c.bf16 %v2079, %v2079
        %v2096 = vpack.c.bf16 %v2080, %v2080
        %v2097 = vpack.c.bf16 %v2081, %v2081
        %v2098 = vpack.c.bf16 %v2082, %v2082
        %v2099 = vpack.c.bf16 %v2083, %v2083
        %v2100 = vpack.c.bf16 %v2084, %v2084
        %v2101 = vpack.c.bf16 %v2085, %v2085
        %v2102 = vpack.c.bf16 %v2086, %v2086
        %v2103 = vpack.c.bf16 %v2087, %v2087
        %2104 = vst [vmem:[%s422] sm:$0xf] %v2088
        %2105 = vst [vmem:[%s422 + $0x4] sm:$0xf] %v2089
        %2106 = vst [vmem:[%s422 + $0x8] sm:$0xf] %v2090
        %2107 = vst [vmem:[%s422 + $0xc] sm:$0xf] %v2091
        %2108 = vst [vmem:[%s422 + $0x10] sm:$0xf] %v2092
        %2109 = vst [vmem:[%s422 + $0x14] sm:$0xf] %v2093
        %2110 = vst [vmem:[%s422 + $0x18] sm:$0xf] %v2094
        %2111 = vst [vmem:[%s422 + $0x1c] sm:$0xf] %v2095
        %2112 = vst [vmem:[%s422 + $0x20] sm:$0xf] %v2096
        %2113 = vst [vmem:[%s422 + $0x24] sm:$0xf] %v2097
        %2114 = vst [vmem:[%s422 + $0x28] sm:$0xf] %v2098
        %2115 = vst [vmem:[%s422 + $0x2c] sm:$0xf] %v2099
        %2116 = vst [vmem:[%s422 + $0x30] sm:$0xf] %v2100
        %2117 = vst [vmem:[%s422 + $0x34] sm:$0xf] %v2101
        %2118 = vst [vmem:[%s422 + $0x38] sm:$0xf] %v2102
        %2119 = vst [vmem:[%s422 + $0x3c] sm:$0xf] %v2103
        %s2120 = sand.u32 %s209, 1
        %s2121 = scalar_lea.sflag [#allocation6], %s2120
        %s2122 = sand.u32 %s209, 1
        %s2123 = smul.addr %s2122, 64
        %s2124 = scalar_lea.vmem [#allocation12], %s2123
        // Predicated region
        $region57: #{tpu_custom_call.1} parent=39 // pred_check
          %p2125 = pneg %p219
        $region58: #{tpu_custom_call.1} parent=39 // pred_check_branch
          %2127 = sbr.rel (%p2125) target = $region60
        $region59: #{tpu_custom_call.1} parent=39 // pred_region
          %s2128 = smul.u32 8, %s33
          %2130 = vsyncadd %s2121, 0
          %s2131 = smul.addr %s2128, 2
          %s2132 = sadd.s32 %s32, %s2131
          %s2133 = smul.addr %s31, 48
          %s2134 = sadd.s32 %s2132, %s2133
          %s2135 = smul.addr %s2134, 4
          %s2136 = scalar_lea.hbm %s5, %s2135
          %s2137 = sshll.u32 %s2124, 4
          %s2138 = int_to_ptr.vmem [resolvable:$true] %s2137
          %s2139 = sshll.u32 %s2136, 4
          %s2140 = int_to_ptr.hbm [resolvable:$true] %s2139
          %2145 = dma.vmem_to_hbm [thread:$0]  %s2138, 1024, %s2140, %s2121, 64, 64, 4
        $region60: #{tpu_custom_call.1} parent=39 // pred_fallthru
          _
      $region40: #{tpu_custom_call.1} parent=5 // pred_fallthru
        _
      %p2146 = scmp.le.s32.totalorder 2, %s21
      // Predicated region
      $region61: #{tpu_custom_call.1} parent=5 // pred_check
        %p2147 = pneg %p2146
      $region62: #{tpu_custom_call.1} parent=5 // pred_check_branch
        %2149 = sbr.rel (%p2147) target = $region64
      $region63: #{tpu_custom_call.1} parent=5 // pred_region
        %s2150 = ssub.s32 %s21, 2
        // Predicated region
        $region65: #{tpu_custom_call.1} parent=63 // pred_check
          %p2151 = pneg %p225
        $region66: #{tpu_custom_call.1} parent=63 // pred_check_branch
          %2153 = sbr.rel (%p2151) target = $region68
        $region67: #{tpu_custom_call.1} parent=63 // pred_region
          %s2154 = sand.u32 %s210, 1
          %s2155 = scalar_lea.sflag [#allocation6], %s2154
          %s2156 = sand.u32 %s210, 1
          %s2157 = smul.addr %s2156, 64
          %s2158 = scalar_lea.vmem [#allocation12], %s2157
          %2160 = dma.done %s2155, 1024
        $region68: #{tpu_custom_call.1} parent=63 // pred_fallthru
          _
      $region64: #{tpu_custom_call.1} parent=5 // pred_fallthru
        _
    $region6: #{tpu_custom_call.1} parent=1 // loop_footer
      %s25 = sadd.s32 1, %s21
    $region7: #{tpu_custom_call.1} parent=1 // loop_footer_branch
      %20 = sbr.rel target = $region3
    $region8: #{tpu_custom_call.1} parent=1 // loop_exit
      _
    %2161 = vsyncpa [#allocation5], 1
    %s2162 = scalar_lea.sflag [#allocation5], 1
    %2163 = vsyncpa %s2162, 1
    %2164 = vsyncpa [#allocation8], 1
    %s2165 = scalar_lea.sflag [#allocation8], 1
    %2166 = vsyncpa %s2165, 1
    %2167 = vsyncpa [#allocation11], 1
    %2168 = vsyncpa [#allocation6], 1
    %s2169 = scalar_lea.sflag [#allocation6], 1
    %2170 = vsyncpa %s2169, 1

</llo_original>
